<compile_context>
chip_gen: v7x
topology: tpu7x:2x2x1
jax: 0.10.0
libtpu: 0.0.40
codegen_flags: <defaults>
</compile_context>

<pallas_src>
import functools

import jax
import jax.numpy as jnp
from jax.experimental import pallas as pl
from jax.experimental.pallas import tpu as pltpu


def _cdiv(a, b):
    return -(-a // b)


def _round_up(n, m):
    return _cdiv(n, m) * m


def _default_min_tiles():
    """>=2 batch tiles on v7x (2 TensorCores); 1 big tile on single-TC chips."""
    try:
        kind = jax.devices()[0].device_kind.lower()
        if "v7" in kind or "7x" in kind:
            return 2
    except Exception:
        pass
    return 1


def _generator_kernel(x_ref, w1_ref, b1_ref, w2_ref, b2_ref, w3_ref, b3_ref,
                      o_ref):
    """Fused 3-layer MLP on one batch tile: bf16 MXU matmuls, f32 epilogue."""
    x = x_ref[...].astype(jnp.bfloat16)  # cast at the MXU boundary (cheap pack)

    # Layer 1: Linear + LeakyReLU(0.1)
    h = jnp.dot(x, w1_ref[...], preferred_element_type=jnp.float32)
    h = h + b1_ref[...]
    h = jnp.maximum(h, 0.1 * h)          # 2 VPU ops instead of cmp+select

    # Layer 2: Linear + LeakyReLU(0.1)
    h = jnp.dot(h.astype(jnp.bfloat16), w2_ref[...],
                preferred_element_type=jnp.float32)
    h = h + b2_ref[...]
    h = jnp.maximum(h, 0.1 * h)

    # Layer 3: Linear + Tanh
    h = jnp.dot(h.astype(jnp.bfloat16), w3_ref[...],
                preferred_element_type=jnp.float32)
    h = h + b3_ref[...]
    o_ref[...] = jnp.tanh(h).astype(o_ref.dtype)   # tanh in f32 (EUP), store bf16


def prepare_params(params):
    """One-time weight prep, hoisted out of the per-call path.

    Pads hidden/output feature dims to 128 lanes (lane-dense MXU tiles and
    unmasked output stores), keeps the TRUE input feature dim (so x is never
    padded per call), and casts matmul operands to bf16. Padded weight columns
    /rows and bias lanes are zero, so padded lanes stay exactly 0 through every
    layer. Returns (prepared_arrays, out_size).
    """
    w1, b1 = params["w1"], params["b1"]
    w2, b2 = params["w2"], params["b2"]
    w3, b3 = params["w3"], params["b3"]
    in_size, hidden = w1.shape
    out_size = w3.shape[1]
    h_p = _round_up(hidden, 128)
    out_p = _round_up(out_size, 128)
    bf = jnp.bfloat16
    prepared = {
        "w1": jnp.zeros((in_size, h_p), bf).at[:, :hidden].set(w1.astype(bf)),
        "b1": jnp.zeros((1, h_p), jnp.float32).at[:, :hidden].set(b1),
        "w2": jnp.zeros((h_p, h_p), bf).at[:hidden, :hidden].set(w2.astype(bf)),
        "b2": jnp.zeros((1, h_p), jnp.float32).at[:, :hidden].set(b2),
        "w3": jnp.zeros((h_p, out_p), bf).at[:hidden, :out_size].set(w3.astype(bf)),
        "b3": jnp.zeros((1, out_p), jnp.float32).at[:, :out_size].set(b3),
    }
    return prepared, int(out_size)


@functools.partial(
    jax.jit, static_argnames=("out_size", "tile_b", "min_tiles", "weight_buffers"))
def generator_forward(x, prepared, *, out_size, tile_b=256, min_tiles=None,
                      weight_buffers=1):
    """Fused generator MLP as a single batch-tiled Pallas call.

    x: (B, input_size) float32 (cast to bf16 inside the kernel)
    prepared: output of prepare_params() (padded bf16 weights, f32 biases)
    Returns (B, out_size) bfloat16.
    """
    w1, b1 = prepared["w1"], prepared["b1"]
    w2, b2 = prepared["w2"], prepared["b2"]
    w3, b3 = prepared["w3"], prepared["b3"]

    B, in_size = x.shape
    h_p = w2.shape[0]
    out_p = w3.shape[1]

    # Batch tiling: one big tile minimizes per-step pipeline overhead; on v7x
    # keep >=2 tiles so dimension_semantics=("parallel",) feeds both TCs.
    if min_tiles is None:
        min_tiles = _default_min_tiles()
    tb_cap = _round_up(_cdiv(B, max(int(min_tiles), 1)), 16)
    tb = max(16, _round_up(min(int(tile_b), tb_cap), 16))
    b_p = _round_up(B, tb)
    n_tiles = b_p // tb

    # Only the batch axis may need padding; skip the pad entirely when B|tb.
    xp = x if b_p == B else jnp.zeros((b_p, in_size), x.dtype).at[:B].set(x)

    def const(a):
        # Constant index_map -> VMEM-resident across the whole grid.
        # Single-buffered (no point double-buffering a block that never moves).
        if weight_buffers is None:
            return pl.BlockSpec(a.shape, lambda i: (0, 0))
        return pl.BlockSpec(a.shape, lambda i: (0, 0),
                            pipeline_mode=pl.Buffered(int(weight_buffers)))

    # Explicit VMEM budget: resident weights/biases + double-buffered x/out
    # tiles + headroom for the f32 intermediates; clamp to [16 MiB, 48 MiB]
    # (safe under v5e's 16 MiB scoped default and v7x's 64 MiB physical).
    nbytes = lambda a: int(a.size) * a.dtype.itemsize
    weight_bytes = sum(nbytes(a) for a in (w1, b1, w2, b2, w3, b3))
    stream_bytes = 2 * tb * in_size * x.dtype.itemsize + 2 * tb * out_p * 2
    scratch_bytes = 2 * tb * h_p * 4
    mib = 1024 * 1024
    vmem_limit = int(min(48 * mib,
                         max(16 * mib,
                             2 * (weight_bytes + stream_bytes + scratch_bytes))))

    flops = 2 * b_p * (in_size * h_p + h_p * h_p + h_p * out_p)
    bytes_accessed = (b_p * in_size * x.dtype.itemsize + weight_bytes
                      + b_p * out_p * 2)

    out_padded = pl.pallas_call(
        _generator_kernel,
        out_shape=jax.ShapeDtypeStruct((b_p, out_p), jnp.bfloat16),
        grid=(n_tiles,),
        in_specs=[
            # x streams per batch tile; true (unpadded) feature dim = full
            # array extent, so the load is legal and un-inflated.
            pl.BlockSpec((tb, in_size), lambda i: (i, 0)),
            const(w1), const(b1),
            const(w2), const(b2),
            const(w3), const(b3),
        ],
        out_specs=pl.BlockSpec((tb, out_p), lambda i: (i, 0)),
        compiler_params=pltpu.CompilerParams(
            dimension_semantics=("parallel",),
            vmem_limit_bytes=vmem_limit),
        cost_estimate=pl.CostEstimate(
            flops=int(flops),
            transcendentals=int(b_p * out_p),
            bytes_accessed=int(bytes_accessed)),
    )(xp, w1, b1, w2, b2, w3, b3)

    return out_padded[:B, :out_size]


def init_params(key, input_size, output_size, hidden_units):
    """Deterministic init mimicking torch Linear (weights stored transposed)."""
    ks = jax.random.split(key, 6)

    def uniform(k, shape, fan_in):
        bound = 1.0 / jnp.sqrt(fan_in)
        return jax.random.uniform(k, shape, jnp.float32, -bound, bound)

    return {
        "w1": uniform(ks[0], (input_size, hidden_units), input_size),
        "b1": uniform(ks[1], (1, hidden_units), input_size),
        "w2": uniform(ks[2], (hidden_units, hidden_units), hidden_units),
        "b2": uniform(ks[3], (1, hidden_units), hidden_units),
        "w3": uniform(ks[4], (hidden_units, output_size), hidden_units),
        "b3": uniform(ks[5], (1, output_size), hidden_units),
    }


def reference_forward(x, p):
    """Pure-JAX reference with the same bf16-operand / f32-accumulate math."""
    bf = jnp.bfloat16
    h = jnp.dot(x.astype(bf), p["w1"].astype(bf),
                preferred_element_type=jnp.float32) + p["b1"]
    h = jnp.maximum(h, 0.1 * h)
    h = jnp.dot(h.astype(bf), p["w2"].astype(bf),
                preferred_element_type=jnp.float32) + p["b2"]
    h = jnp.maximum(h, 0.1 * h)
    h = jnp.dot(h.astype(bf), p["w3"].astype(bf),
                preferred_element_type=jnp.float32) + p["b3"]
    return jnp.tanh(h)


if __name__ == "__main__":
    key = jax.random.PRNGKey(0)
    k_param, k_x = jax.random.split(key)

    batch = 256          # small, but enough to exercise batch tiling
    input_size = 16      # latent dim
    hidden_units = 32
    output_size = 16

    params = init_params(k_param, input_size, output_size, hidden_units)
    # One-time weight prep (pad + bf16 cast), hoisted out of the forward path.
    prepared, out_size = prepare_params(params)

    x = jax.random.normal(k_x, (batch, input_size), jnp.float32)

    try:
        out = generator_forward(x, prepared, out_size=out_size)
    except Exception:
        # Compatibility fallback if BlockSpec pipeline_mode (single-buffered
        # weights) is unsupported by the installed jax; default buffering.
        out = generator_forward(x, prepared, out_size=out_size,
                                weight_buffers=None)
    out = jax.block_until_ready(out)

    ref = reference_forward(x, params)
    assert out.shape == (batch, output_size), out.shape
    # Output is bf16 (post-tanh values in [-1, 1]); allow bf16 rounding error.
    err = float(jnp.max(jnp.abs(out.astype(jnp.float32) - ref)))
    assert err < 1e-2, err
    # sanity: padded lanes/rows never leak (tanh output strictly in [-1, 1])
    assert float(jnp.max(jnp.abs(out.astype(jnp.float32)))) <= 1.0

    print("KERNEL_OK")
</pallas_src>

<mosaic_0001>
module attributes {stable_mosaic.version = 11 : i64} {
  func.func @_generator_kernel(%arg0: i32, %arg1: memref<256x16xf32, #tpu.memory_space<vmem>>, %arg2: memref<16x128xbf16, #tpu.memory_space<vmem>>, %arg3: memref<1x128xf32, #tpu.memory_space<vmem>>, %arg4: memref<128x128xbf16, #tpu.memory_space<vmem>>, %arg5: memref<1x128xf32, #tpu.memory_space<vmem>>, %arg6: memref<128x128xbf16, #tpu.memory_space<vmem>>, %arg7: memref<1x128xf32, #tpu.memory_space<vmem>>, %arg8: memref<256x128xbf16, #tpu.memory_space<vmem>>) attributes {dimension_semantics = [#tpu.dimension_semantics<parallel>], iteration_bounds = array<i64: 1>, scalar_prefetch = 0 : i64, scratch_operands = 0 : i64, tpu.core_type = #tpu.core_type<tc>, window_params = [{transform_indices = @transform_0, window_bounds = array<i64: 256, 16>}, {pipeline_mode = #tpu.pipeline_mode<synchronous>, transform_indices = @transform_1, window_bounds = array<i64: 16, 128>}, {pipeline_mode = #tpu.pipeline_mode<synchronous>, transform_indices = @transform_2, window_bounds = array<i64: 1, 128>}, {pipeline_mode = #tpu.pipeline_mode<synchronous>, transform_indices = @transform_3, window_bounds = array<i64: 128, 128>}, {pipeline_mode = #tpu.pipeline_mode<synchronous>, transform_indices = @transform_4, window_bounds = array<i64: 1, 128>}, {pipeline_mode = #tpu.pipeline_mode<synchronous>, transform_indices = @transform_5, window_bounds = array<i64: 128, 128>}, {pipeline_mode = #tpu.pipeline_mode<synchronous>, transform_indices = @transform_6, window_bounds = array<i64: 1, 128>}, {transform_indices = @transform_7, window_bounds = array<i64: 256, 128>}]} {
    %c0 = arith.constant 0 : index
    %c0_0 = arith.constant 0 : index
    %0 = vector.load %arg1[%c0, %c0_0] : memref<256x16xf32, #tpu.memory_space<vmem>>, vector<256x16xf32>
    %1 = arith.truncf %0 : vector<256x16xf32> to vector<256x16xbf16>
    %c0_1 = arith.constant 0 : index
    %c0_2 = arith.constant 0 : index
    %2 = vector.load %arg2[%c0_1, %c0_2] : memref<16x128xbf16, #tpu.memory_space<vmem>>, vector<16x128xbf16>
    %cst = arith.constant dense<0.000000e+00> : vector<256x128xf32>
    %3 = tpu.matmul %1, %2, %cst {dimension_numbers = #tpu.dot_dimension_numbers<[1], [0], [0], [1], [0, 0, 1, 1], [], []>} : vector<256x16xbf16>, vector<16x128xbf16>, vector<256x128xf32> -> vector<256x128xf32>
    %c0_3 = arith.constant 0 : index
    %c0_4 = arith.constant 0 : index
    %4 = vector.load %arg3[%c0_3, %c0_4] : memref<1x128xf32, #tpu.memory_space<vmem>>, vector<1x128xf32>
    %5 = vector.broadcast %4 : vector<1x128xf32> to vector<256x128xf32>
    %6 = arith.addf %3, %5 : vector<256x128xf32>
    %cst_5 = arith.constant 1.000000e-01 : f32
    %7 = vector.broadcast %cst_5 : f32 to vector<256x128xf32>
    %8 = arith.mulf %7, %6 : vector<256x128xf32>
    %9 = arith.maximumf %6, %8 : vector<256x128xf32>
    %10 = arith.truncf %9 : vector<256x128xf32> to vector<256x128xbf16>
    %c0_6 = arith.constant 0 : index
    %c0_7 = arith.constant 0 : index
    %11 = vector.load %arg4[%c0_6, %c0_7] : memref<128x128xbf16, #tpu.memory_space<vmem>>, vector<128x128xbf16>
    %cst_8 = arith.constant dense<0.000000e+00> : vector<256x128xf32>
    %12 = tpu.matmul %10, %11, %cst_8 {dimension_numbers = #tpu.dot_dimension_numbers<[1], [0], [0], [1], [0, 0, 1, 1], [], []>} : vector<256x128xbf16>, vector<128x128xbf16>, vector<256x128xf32> -> vector<256x128xf32>
    %c0_9 = arith.constant 0 : index
    %c0_10 = arith.constant 0 : index
    %13 = vector.load %arg5[%c0_9, %c0_10] : memref<1x128xf32, #tpu.memory_space<vmem>>, vector<1x128xf32>
    %14 = vector.broadcast %13 : vector<1x128xf32> to vector<256x128xf32>
    %15 = arith.addf %12, %14 : vector<256x128xf32>
    %cst_11 = arith.constant 1.000000e-01 : f32
    %16 = vector.broadcast %cst_11 : f32 to vector<256x128xf32>
    %17 = arith.mulf %16, %15 : vector<256x128xf32>
    %18 = arith.maximumf %15, %17 : vector<256x128xf32>
    %19 = arith.truncf %18 : vector<256x128xf32> to vector<256x128xbf16>
    %c0_12 = arith.constant 0 : index
    %c0_13 = arith.constant 0 : index
    %20 = vector.load %arg6[%c0_12, %c0_13] : memref<128x128xbf16, #tpu.memory_space<vmem>>, vector<128x128xbf16>
    %cst_14 = arith.constant dense<0.000000e+00> : vector<256x128xf32>
    %21 = tpu.matmul %19, %20, %cst_14 {dimension_numbers = #tpu.dot_dimension_numbers<[1], [0], [0], [1], [0, 0, 1, 1], [], []>} : vector<256x128xbf16>, vector<128x128xbf16>, vector<256x128xf32> -> vector<256x128xf32>
    %c0_15 = arith.constant 0 : index
    %c0_16 = arith.constant 0 : index
    %22 = vector.load %arg7[%c0_15, %c0_16] : memref<1x128xf32, #tpu.memory_space<vmem>>, vector<1x128xf32>
    %23 = vector.broadcast %22 : vector<1x128xf32> to vector<256x128xf32>
    %24 = arith.addf %21, %23 : vector<256x128xf32>
    %25 = math.tanh %24 : vector<256x128xf32>
    %26 = arith.truncf %25 : vector<256x128xf32> to vector<256x128xbf16>
    %c0_17 = arith.constant 0 : index
    %c0_18 = arith.constant 0 : index
    %27 = vector.load %arg8[%c0_17, %c0_18] : memref<256x128xbf16, #tpu.memory_space<vmem>>, vector<256x128xbf16>
    tpu.vector_store %arg8[%c0_17, %c0_18], %26 {strides = array<i32>} : memref<256x128xbf16, #tpu.memory_space<vmem>>, vector<256x128xbf16>,
    return
  }
  func.func @transform_0(%arg0: i32) -> (i32, i32) {
    %c0_i32 = arith.constant 0 : i32
    %c0_i32_0 = arith.constant 0 : i32
    return %arg0, %c0_i32 : i32, i32
  }
  func.func @transform_1(%arg0: i32) -> (i32, i32) {
    %c0_i32 = arith.constant 0 : i32
    %c0_i32_0 = arith.constant 0 : i32
    %c0_i32_1 = arith.constant 0 : i32
    return %c0_i32, %c0_i32_0 : i32, i32
  }
  func.func @transform_2(%arg0: i32) -> (i32, i32) {
    %c0_i32 = arith.constant 0 : i32
    %c0_i32_0 = arith.constant 0 : i32
    %c0_i32_1 = arith.constant 0 : i32
    return %c0_i32, %c0_i32_0 : i32, i32
  }
  func.func @transform_3(%arg0: i32) -> (i32, i32) {
    %c0_i32 = arith.constant 0 : i32
    %c0_i32_0 = arith.constant 0 : i32
    %c0_i32_1 = arith.constant 0 : i32
    return %c0_i32, %c0_i32_0 : i32, i32
  }
  func.func @transform_4(%arg0: i32) -> (i32, i32) {
    %c0_i32 = arith.constant 0 : i32
    %c0_i32_0 = arith.constant 0 : i32
    %c0_i32_1 = arith.constant 0 : i32
    return %c0_i32, %c0_i32_0 : i32, i32
  }
  func.func @transform_5(%arg0: i32) -> (i32, i32) {
    %c0_i32 = arith.constant 0 : i32
    %c0_i32_0 = arith.constant 0 : i32
    %c0_i32_1 = arith.constant 0 : i32
    return %c0_i32, %c0_i32_0 : i32, i32
  }
  func.func @transform_6(%arg0: i32) -> (i32, i32) {
    %c0_i32 = arith.constant 0 : i32
    %c0_i32_0 = arith.constant 0 : i32
    %c0_i32_1 = arith.constant 0 : i32
    return %c0_i32, %c0_i32_0 : i32, i32
  }
  func.func @transform_7(%arg0: i32) -> (i32, i32) {
    %c0_i32 = arith.constant 0 : i32
    %c0_i32_0 = arith.constant 0 : i32
    return %arg0, %c0_i32 : i32, i32
  }
}

module attributes {stable_mosaic.version = 11 : i64} {
  func.func @_generator_kernel(%arg0: i32, %arg1: memref<256x16xf32, #tpu.memory_space<vmem>>, %arg2: memref<16x128xbf16, #tpu.memory_space<vmem>>, %arg3: memref<1x128xf32, #tpu.memory_space<vmem>>, %arg4: memref<128x128xbf16, #tpu.memory_space<vmem>>, %arg5: memref<1x128xf32, #tpu.memory_space<vmem>>, %arg6: memref<128x128xbf16, #tpu.memory_space<vmem>>, %arg7: memref<1x128xf32, #tpu.memory_space<vmem>>, %arg8: memref<256x128xbf16, #tpu.memory_space<vmem>>) attributes {dimension_semantics = [#tpu.dimension_semantics<parallel>], iteration_bounds = array<i64: 1>, scalar_prefetch = 0 : i64, scratch_operands = 0 : i64, tpu.core_type = #tpu.core_type<tc>, window_params = [{transform_indices = @transform_0, window_bounds = array<i64: 256, 16>}, {pipeline_mode = #tpu.pipeline_mode<synchronous>, transform_indices = @transform_1, window_bounds = array<i64: 16, 128>}, {pipeline_mode = #tpu.pipeline_mode<synchronous>, transform_indices = @transform_2, window_bounds = array<i64: 1, 128>}, {pipeline_mode = #tpu.pipeline_mode<synchronous>, transform_indices = @transform_3, window_bounds = array<i64: 128, 128>}, {pipeline_mode = #tpu.pipeline_mode<synchronous>, transform_indices = @transform_4, window_bounds = array<i64: 1, 128>}, {pipeline_mode = #tpu.pipeline_mode<synchronous>, transform_indices = @transform_5, window_bounds = array<i64: 128, 128>}, {pipeline_mode = #tpu.pipeline_mode<synchronous>, transform_indices = @transform_6, window_bounds = array<i64: 1, 128>}, {transform_indices = @transform_7, window_bounds = array<i64: 256, 128>}]} {
    %c0 = arith.constant 0 : index
    %c0_0 = arith.constant 0 : index
    %0 = vector.load %arg1[%c0, %c0_0] : memref<256x16xf32, #tpu.memory_space<vmem>>, vector<256x16xf32>
    %1 = arith.truncf %0 : vector<256x16xf32> to vector<256x16xbf16>
    %c0_1 = arith.constant 0 : index
    %c0_2 = arith.constant 0 : index
    %2 = vector.load %arg2[%c0_1, %c0_2] : memref<16x128xbf16, #tpu.memory_space<vmem>>, vector<16x128xbf16>
    %cst = arith.constant dense<0.000000e+00> : vector<256x128xf32>
    %3 = tpu.matmul %1, %2, %cst {dimension_numbers = #tpu.dot_dimension_numbers<[1], [0], [0], [1], [0, 0, 1, 1], [], []>} : vector<256x16xbf16>, vector<16x128xbf16>, vector<256x128xf32> -> vector<256x128xf32>
    %c0_3 = arith.constant 0 : index
    %c0_4 = arith.constant 0 : index
    %4 = vector.load %arg3[%c0_3, %c0_4] : memref<1x128xf32, #tpu.memory_space<vmem>>, vector<1x128xf32>
    %5 = vector.broadcast %4 : vector<1x128xf32> to vector<256x128xf32>
    %6 = arith.addf %3, %5 : vector<256x128xf32>
    %cst_5 = arith.constant 1.000000e-01 : f32
    %7 = vector.broadcast %cst_5 : f32 to vector<256x128xf32>
    %8 = arith.mulf %7, %6 : vector<256x128xf32>
    %9 = arith.maximumf %6, %8 : vector<256x128xf32>
    %10 = arith.truncf %9 : vector<256x128xf32> to vector<256x128xbf16>
    %c0_6 = arith.constant 0 : index
    %c0_7 = arith.constant 0 : index
    %11 = vector.load %arg4[%c0_6, %c0_7] : memref<128x128xbf16, #tpu.memory_space<vmem>>, vector<128x128xbf16>
    %cst_8 = arith.constant dense<0.000000e+00> : vector<256x128xf32>
    %12 = tpu.matmul %10, %11, %cst_8 {dimension_numbers = #tpu.dot_dimension_numbers<[1], [0], [0], [1], [0, 0, 1, 1], [], []>} : vector<256x128xbf16>, vector<128x128xbf16>, vector<256x128xf32> -> vector<256x128xf32>
    %c0_9 = arith.constant 0 : index
    %c0_10 = arith.constant 0 : index
    %13 = vector.load %arg5[%c0_9, %c0_10] : memref<1x128xf32, #tpu.memory_space<vmem>>, vector<1x128xf32>
    %14 = vector.broadcast %13 : vector<1x128xf32> to vector<256x128xf32>
    %15 = arith.addf %12, %14 : vector<256x128xf32>
    %cst_11 = arith.constant 1.000000e-01 : f32
    %16 = vector.broadcast %cst_11 : f32 to vector<256x128xf32>
    %17 = arith.mulf %16, %15 : vector<256x128xf32>
    %18 = arith.maximumf %15, %17 : vector<256x128xf32>
    %19 = arith.truncf %18 : vector<256x128xf32> to vector<256x128xbf16>
    %c0_12 = arith.constant 0 : index
    %c0_13 = arith.constant 0 : index
    %20 = vector.load %arg6[%c0_12, %c0_13] : memref<128x128xbf16, #tpu.memory_space<vmem>>, vector<128x128xbf16>
    %cst_14 = arith.constant dense<0.000000e+00> : vector<256x128xf32>
    %21 = tpu.matmul %19, %20, %cst_14 {dimension_numbers = #tpu.dot_dimension_numbers<[1], [0], [0], [1], [0, 0, 1, 1], [], []>} : vector<256x128xbf16>, vector<128x128xbf16>, vector<256x128xf32> -> vector<256x128xf32>
    %c0_15 = arith.constant 0 : index
    %c0_16 = arith.constant 0 : index
    %22 = vector.load %arg7[%c0_15, %c0_16] : memref<1x128xf32, #tpu.memory_space<vmem>>, vector<1x128xf32>
    %23 = vector.broadcast %22 : vector<1x128xf32> to vector<256x128xf32>
    %24 = arith.addf %21, %23 : vector<256x128xf32>
    %25 = math.tanh %24 : vector<256x128xf32>
    %26 = arith.truncf %25 : vector<256x128xf32> to vector<256x128xbf16>
    %c0_17 = arith.constant 0 : index
    %c0_18 = arith.constant 0 : index
    %27 = vector.load %arg8[%c0_17, %c0_18] : memref<256x128xbf16, #tpu.memory_space<vmem>>, vector<256x128xbf16>
    tpu.vector_store %arg8[%c0_17, %c0_18], %26 {strides = array<i32>} : memref<256x128xbf16, #tpu.memory_space<vmem>>, vector<256x128xbf16>,
    return
  }
  func.func @transform_0(%arg0: i32) -> (i32, i32) {
    %c0_i32 = arith.constant 0 : i32
    %c0_i32_0 = arith.constant 0 : i32
    return %arg0, %c0_i32 : i32, i32
  }
  func.func @transform_1(%arg0: i32) -> (i32, i32) {
    %c0_i32 = arith.constant 0 : i32
    %c0_i32_0 = arith.constant 0 : i32
    %c0_i32_1 = arith.constant 0 : i32
    return %c0_i32, %c0_i32_0 : i32, i32
  }
  func.func @transform_2(%arg0: i32) -> (i32, i32) {
    %c0_i32 = arith.constant 0 : i32
    %c0_i32_0 = arith.constant 0 : i32
    %c0_i32_1 = arith.constant 0 : i32
    return %c0_i32, %c0_i32_0 : i32, i32
  }
  func.func @transform_3(%arg0: i32) -> (i32, i32) {
    %c0_i32 = arith.constant 0 : i32
    %c0_i32_0 = arith.constant 0 : i32
    %c0_i32_1 = arith.constant 0 : i32
    return %c0_i32, %c0_i32_0 : i32, i32
  }
  func.func @transform_4(%arg0: i32) -> (i32, i32) {
    %c0_i32 = arith.constant 0 : i32
    %c0_i32_0 = arith.constant 0 : i32
    %c0_i32_1 = arith.constant 0 : i32
    return %c0_i32, %c0_i32_0 : i32, i32
  }
  func.func @transform_5(%arg0: i32) -> (i32, i32) {
    %c0_i32 = arith.constant 0 : i32
    %c0_i32_0 = arith.constant 0 : i32
    %c0_i32_1 = arith.constant 0 : i32
    return %c0_i32, %c0_i32_0 : i32, i32
  }
  func.func @transform_6(%arg0: i32) -> (i32, i32) {
    %c0_i32 = arith.constant 0 : i32
    %c0_i32_0 = arith.constant 0 : i32
    %c0_i32_1 = arith.constant 0 : i32
    return %c0_i32, %c0_i32_0 : i32, i32
  }
  func.func @transform_7(%arg0: i32) -> (i32, i32) {
    %c0_i32 = arith.constant 0 : i32
    %c0_i32_0 = arith.constant 0 : i32
    return %arg0, %c0_i32 : i32, i32
  }
}

</mosaic_0001>

<llo_original>
// kernel: generator_forward.1
$region0: #{generator_forward.1}
  #allocation0 [shape = 'u32[]', space=smem, size = 0x4, offset = 0x4, fixed_abs, tag = 'smem constant byte address 0x4 - core index']
  #allocation1 [shape = 'u32[144,128]{1,0:T(1,128)}', space=vmem, size = 0x12000, scoped, tag = 'internal scratch']
  %s0 = inlined_call_operand.vmem [shape: f32[256,16], index: 0, kind: input, shape index: {}]
  %s1 = inlined_call_operand.vmem [shape: bf16[16,128], index: 1, kind: input, shape index: {}]
  %s2 = inlined_call_operand.vmem [shape: f32[1,128], index: 2, kind: input, shape index: {}]
  %s3 = inlined_call_operand.vmem [shape: bf16[128,128], index: 3, kind: input, shape index: {}]
  %s4 = inlined_call_operand.vmem [shape: f32[1,128], index: 4, kind: input, shape index: {}]
  %s5 = inlined_call_operand.vmem [shape: bf16[128,128], index: 5, kind: input, shape index: {}]
  %s6 = inlined_call_operand.vmem [shape: f32[1,128], index: 6, kind: input, shape index: {}]
  %s7 = inlined_call_operand.vmem [shape: bf16[256,128], index: 7, kind: output, shape index: {}]
  %s8 = sld [smem:[#allocation0]]
  $region38: #{generator_forward.1} parent=0
    _
  %s10 = ssub.s32 1, %s8
  %s11 = scalar_select 0, %s10, %s8
  // Predicated region
  $region2: #{generator_forward.1} parent=0 // pred_check
    _
  $region3: #{generator_forward.1} parent=0 // pred_check_branch
    %13 = sbr.rel (0) target = $region5
  $region4: #{generator_forward.1} parent=0 // pred_region
    _
  $region5: #{generator_forward.1} parent=0 // pred_fallthru
    _
  // Predicated region
  $region6: #{generator_forward.1} parent=0 // pred_check
    _
  $region7: #{generator_forward.1} parent=0 // pred_check_branch
    %15 = sbr.rel (0) target = $region9
  $region8: #{generator_forward.1} parent=0 // pred_region
    _
  $region9: #{generator_forward.1} parent=0 // pred_fallthru
    _
  // Predicated region
  $region10: #{generator_forward.1} parent=0 // pred_check
    _
  $region11: #{generator_forward.1} parent=0 // pred_check_branch
    %17 = sbr.rel (0) target = $region13
  $region12: #{generator_forward.1} parent=0 // pred_region
    _
  $region13: #{generator_forward.1} parent=0 // pred_fallthru
    _
  // Predicated region
  $region14: #{generator_forward.1} parent=0 // pred_check
    _
  $region15: #{generator_forward.1} parent=0 // pred_check_branch
    %19 = sbr.rel (0) target = $region17
  $region16: #{generator_forward.1} parent=0 // pred_region
    _
  $region17: #{generator_forward.1} parent=0 // pred_fallthru
    _
  // Predicated region
  $region18: #{generator_forward.1} parent=0 // pred_check
    _
  $region19: #{generator_forward.1} parent=0 // pred_check_branch
    %21 = sbr.rel (0) target = $region21
  $region20: #{generator_forward.1} parent=0 // pred_region
    _
  $region21: #{generator_forward.1} parent=0 // pred_fallthru
    _
  // Predicated region
  $region22: #{generator_forward.1} parent=0 // pred_check
    _
  $region23: #{generator_forward.1} parent=0 // pred_check_branch
    %23 = sbr.rel (0) target = $region25
  $region24: #{generator_forward.1} parent=0 // pred_region
    _
  $region25: #{generator_forward.1} parent=0 // pred_fallthru
    _
  // Predicated region
  $region26: #{generator_forward.1} parent=0 // pred_check
    _
  $region27: #{generator_forward.1} parent=0 // pred_check_branch
    %25 = sbr.rel (0) target = $region29
  $region28: #{generator_forward.1} parent=0 // pred_region
    _
  $region29: #{generator_forward.1} parent=0 // pred_fallthru
    _
  %v27 = vld [vmem:[%s0] sm:$0xff]
  %v28 = vld [vmem:[%s0 + $0x8] sm:$0xff]
  %v29 = vld [vmem:[%s0 + $0x10] sm:$0xff]
  %v30 = vld [vmem:[%s0 + $0x18] sm:$0xff]
  %v31 = vld [vmem:[%s0 + $0x20] sm:$0xff]
  %v32 = vld [vmem:[%s0 + $0x28] sm:$0xff]
  %v33 = vld [vmem:[%s0 + $0x30] sm:$0xff]
  %v34 = vld [vmem:[%s0 + $0x38] sm:$0xff]
  %v35 = vld [vmem:[%s0 + $0x40] sm:$0xff]
  %v36 = vld [vmem:[%s0 + $0x48] sm:$0xff]
  %v37 = vld [vmem:[%s0 + $0x50] sm:$0xff]
  %v38 = vld [vmem:[%s0 + $0x58] sm:$0xff]
  %v39 = vld [vmem:[%s0 + $0x60] sm:$0xff]
  %v40 = vld [vmem:[%s0 + $0x68] sm:$0xff]
  %v41 = vld [vmem:[%s0 + $0x70] sm:$0xff]
  %v42 = vld [vmem:[%s0 + $0x78] sm:$0xff]
  %v43 = vld [vmem:[%s0 + $0x80] sm:$0xff]
  %v44 = vld [vmem:[%s0 + $0x88] sm:$0xff]
  %v45 = vld [vmem:[%s0 + $0x90] sm:$0xff]
  %v46 = vld [vmem:[%s0 + $0x98] sm:$0xff]
  %v47 = vld [vmem:[%s0 + $0xa0] sm:$0xff]
  %v48 = vld [vmem:[%s0 + $0xa8] sm:$0xff]
  %v49 = vld [vmem:[%s0 + $0xb0] sm:$0xff]
  %v50 = vld [vmem:[%s0 + $0xb8] sm:$0xff]
  %v51 = vld [vmem:[%s0 + $0xc0] sm:$0xff]
  %v52 = vld [vmem:[%s0 + $0xc8] sm:$0xff]
  %v53 = vld [vmem:[%s0 + $0xd0] sm:$0xff]
  %v54 = vld [vmem:[%s0 + $0xd8] sm:$0xff]
  %v55 = vld [vmem:[%s0 + $0xe0] sm:$0xff]
  %v56 = vld [vmem:[%s0 + $0xe8] sm:$0xff]
  %v57 = vld [vmem:[%s0 + $0xf0] sm:$0xff]
  %v58 = vld [vmem:[%s0 + $0xf8] sm:$0xff]
  %v59 = vpack.c.bf16 %v28, %v27
  %v60 = vpack.c.bf16 %v30, %v29
  %v61 = vpack.c.bf16 %v32, %v31
  %v62 = vpack.c.bf16 %v34, %v33
  %v63 = vpack.c.bf16 %v36, %v35
  %v64 = vpack.c.bf16 %v38, %v37
  %v65 = vpack.c.bf16 %v40, %v39
  %v66 = vpack.c.bf16 %v42, %v41
  %v67 = vpack.c.bf16 %v44, %v43
  %v68 = vpack.c.bf16 %v46, %v45
  %v69 = vpack.c.bf16 %v48, %v47
  %v70 = vpack.c.bf16 %v50, %v49
  %v71 = vpack.c.bf16 %v52, %v51
  %v72 = vpack.c.bf16 %v54, %v53
  %v73 = vpack.c.bf16 %v56, %v55
  %v74 = vpack.c.bf16 %v58, %v57
  %v75 = vld [vmem:[%s1] sm:$0xf]
  %v76 = vld [vmem:[%s1 + $0x4] sm:$0xf]
  %v77 = vld [vmem:[%s2] sm:$0x1]
  %v79 = vlaneseq
  %v80 = vshrl.u32 %v79, 7
  %v81 = vsub.s32 0, %v80
  %v82 = vrot.slane %v77, %v81
  %v86 = vunpack.c.l.b16 %v75
  %v87 = vunpack.c.l.b16 %v76
  %v88 = vpack.c.b16 %v87, %v86
  %vm90 = vcmask 130048
  %v92 = vsel %vm90, %v59, 0
  %v95 = vsel %vm90, %v60, 0
  %v98 = vsel %vm90, %v61, 0
  %v101 = vsel %vm90, %v62, 0
  %v104 = vsel %vm90, %v63, 0
  %v107 = vsel %vm90, %v64, 0
  %v110 = vsel %vm90, %v65, 0
  %v113 = vsel %vm90, %v66, 0
  %v116 = vsel %vm90, %v67, 0
  %v119 = vsel %vm90, %v68, 0
  %v122 = vsel %vm90, %v69, 0
  %v125 = vsel %vm90, %v70, 0
  %v128 = vsel %vm90, %v71, 0
  %v131 = vsel %vm90, %v72, 0
  %v134 = vsel %vm90, %v73, 0
  %v137 = vsel %vm90, %v74, 0
  %139 = vmatprep.subr.bf16.mxu0 0
  %140 = vmatpush1.bf16.msra.mxu0 %v88
  %141 = vmatprep.subr.bf16.mxu0 0
  %142 = vmatpush1.bf16.msra.mxu0 0
  %143 = vmatprep.subr.bf16.mxu0 0
  %144 = vmatpush1.bf16.msra.mxu0 0
  %145 = vmatprep.subr.bf16.mxu0 0
  %146 = vmatpush1.bf16.msra.mxu0 0
  %147 = vmatprep.subr.bf16.mxu0 0
  %148 = vmatpush1.bf16.msra.mxu0 0
  %149 = vmatprep.subr.bf16.mxu0 0
  %150 = vmatpush1.bf16.msra.mxu0 0
  %151 = vmatprep.subr.bf16.mxu0 0
  %152 = vmatpush1.bf16.msra.mxu0 0
  %153 = vmatprep.subr.bf16.mxu0 0
  %154 = vmatpush1.bf16.msra.mxu0 0
  %155 = vmatprep.subr.bf16.mxu0 0
  %156 = vmatpush1.bf16.msra.mxu0 0
  %157 = vmatprep.subr.bf16.mxu0 0
  %158 = vmatpush1.bf16.msra.mxu0 0
  %159 = vmatprep.subr.bf16.mxu0 0
  %160 = vmatpush1.bf16.msra.mxu0 0
  %161 = vmatprep.subr.bf16.mxu0 0
  %162 = vmatpush1.bf16.msra.mxu0 0
  %163 = vmatprep.subr.bf16.mxu0 0
  %164 = vmatpush1.bf16.msra.mxu0 0
  %165 = vmatprep.subr.bf16.mxu0 0
  %166 = vmatpush1.bf16.msra.mxu0 0
  %167 = vmatprep.subr.bf16.mxu0 0
  %168 = vmatpush1.bf16.msra.mxu0 0
  %169 = vmatprep.subr.bf16.mxu0 0
  %170 = vmatpush1.bf16.msra.mxu0 0
  %171 = vmatprep.mubr.bf16.mxu0 0
  %172 = vmatmul.mubr.bf16.gmra.mrb[0].mxu0 %v92
  %v173 = vpop.f32.mrb[0].mxu0
  %v174 = vadd.f32 %v82, %v173
  %v175 = vpop.f32.mrb[0].mxu0
  %v176 = vpop.f32.mrb[0].mxu0
  %v177 = vadd.f32 %v82, %v176
  %v178 = vpop.f32.mrb[0].mxu0
  %179 = vmatprep.mubr.bf16.mxu0 0
  %180 = vmatmul.mubr.bf16.gmra.mrb[0].mxu0 %v95
  %v181 = vpop.f32.mrb[0].mxu0
  %v182 = vadd.f32 %v82, %v181
  %v183 = vpop.f32.mrb[0].mxu0
  %v184 = vpop.f32.mrb[0].mxu0
  %v185 = vadd.f32 %v82, %v184
  %v186 = vpop.f32.mrb[0].mxu0
  %187 = vmatprep.mubr.bf16.mxu0 0
  %188 = vmatmul.mubr.bf16.gmra.mrb[0].mxu0 %v98
  %v189 = vpop.f32.mrb[0].mxu0
  %v190 = vadd.f32 %v82, %v189
  %v191 = vpop.f32.mrb[0].mxu0
  %v192 = vpop.f32.mrb[0].mxu0
  %v193 = vadd.f32 %v82, %v192
  %v194 = vpop.f32.mrb[0].mxu0
  %195 = vmatprep.mubr.bf16.mxu0 0
  %196 = vmatmul.mubr.bf16.gmra.mrb[0].mxu0 %v101
  %v197 = vpop.f32.mrb[0].mxu0
  %v198 = vadd.f32 %v82, %v197
  %v199 = vpop.f32.mrb[0].mxu0
  %v200 = vpop.f32.mrb[0].mxu0
  %v201 = vadd.f32 %v82, %v200
  %v202 = vpop.f32.mrb[0].mxu0
  %203 = vmatprep.mubr.bf16.mxu0 0
  %204 = vmatmul.mubr.bf16.gmra.mrb[0].mxu0 %v104
  %v205 = vpop.f32.mrb[0].mxu0
  %v206 = vadd.f32 %v82, %v205
  %v207 = vpop.f32.mrb[0].mxu0
  %v208 = vpop.f32.mrb[0].mxu0
  %v209 = vadd.f32 %v82, %v208
  %v210 = vpop.f32.mrb[0].mxu0
  %211 = vmatprep.mubr.bf16.mxu0 0
  %212 = vmatmul.mubr.bf16.gmra.mrb[0].mxu0 %v107
  %v213 = vpop.f32.mrb[0].mxu0
  %v214 = vadd.f32 %v82, %v213
  %v215 = vpop.f32.mrb[0].mxu0
  %v216 = vpop.f32.mrb[0].mxu0
  %v217 = vadd.f32 %v82, %v216
  %v218 = vpop.f32.mrb[0].mxu0
  %219 = vmatprep.mubr.bf16.mxu0 0
  %220 = vmatmul.mubr.bf16.gmra.mrb[0].mxu0 %v110
  %v221 = vpop.f32.mrb[0].mxu0
  %v222 = vadd.f32 %v82, %v221
  %v223 = vpop.f32.mrb[0].mxu0
  %v224 = vpop.f32.mrb[0].mxu0
  %v225 = vadd.f32 %v82, %v224
  %v226 = vpop.f32.mrb[0].mxu0
  %227 = vmatprep.mubr.bf16.mxu0 0
  %228 = vmatmul.mubr.bf16.gmra.mrb[0].mxu0 %v113
  %v229 = vpop.f32.mrb[0].mxu0
  %v230 = vadd.f32 %v82, %v229
  %v231 = vpop.f32.mrb[0].mxu0
  %v232 = vpop.f32.mrb[0].mxu0
  %v233 = vadd.f32 %v82, %v232
  %v234 = vpop.f32.mrb[0].mxu0
  %235 = vmatprep.mubr.bf16.mxu0 0
  %236 = vmatmul.mubr.bf16.gmra.mrb[0].mxu0 %v116
  %v237 = vpop.f32.mrb[0].mxu0
  %v238 = vadd.f32 %v82, %v237
  %v239 = vpop.f32.mrb[0].mxu0
  %v240 = vpop.f32.mrb[0].mxu0
  %v241 = vadd.f32 %v82, %v240
  %v242 = vpop.f32.mrb[0].mxu0
  %243 = vmatprep.mubr.bf16.mxu0 0
  %244 = vmatmul.mubr.bf16.gmra.mrb[0].mxu0 %v119
  %v245 = vpop.f32.mrb[0].mxu0
  %v246 = vadd.f32 %v82, %v245
  %v247 = vpop.f32.mrb[0].mxu0
  %v248 = vpop.f32.mrb[0].mxu0
  %v249 = vadd.f32 %v82, %v248
  %v250 = vpop.f32.mrb[0].mxu0
  %251 = vmatprep.mubr.bf16.mxu0 0
  %252 = vmatmul.mubr.bf16.gmra.mrb[0].mxu0 %v122
  %v253 = vpop.f32.mrb[0].mxu0
  %v254 = vadd.f32 %v82, %v253
  %v255 = vpop.f32.mrb[0].mxu0
  %v256 = vpop.f32.mrb[0].mxu0
  %v257 = vadd.f32 %v82, %v256
  %v258 = vpop.f32.mrb[0].mxu0
  %259 = vmatprep.mubr.bf16.mxu0 0
  %260 = vmatmul.mubr.bf16.gmra.mrb[0].mxu0 %v125
  %v261 = vpop.f32.mrb[0].mxu0
  %v262 = vadd.f32 %v82, %v261
  %v263 = vpop.f32.mrb[0].mxu0
  %v264 = vpop.f32.mrb[0].mxu0
  %v265 = vadd.f32 %v82, %v264
  %v266 = vpop.f32.mrb[0].mxu0
  %267 = vmatprep.mubr.bf16.mxu0 0
  %268 = vmatmul.mubr.bf16.gmra.mrb[0].mxu0 %v128
  %v269 = vpop.f32.mrb[0].mxu0
  %v270 = vadd.f32 %v82, %v269
  %v271 = vpop.f32.mrb[0].mxu0
  %v272 = vpop.f32.mrb[0].mxu0
  %v273 = vadd.f32 %v82, %v272
  %v274 = vpop.f32.mrb[0].mxu0
  %275 = vmatprep.mubr.bf16.mxu0 0
  %276 = vmatmul.mubr.bf16.gmra.mrb[0].mxu0 %v131
  %v277 = vpop.f32.mrb[0].mxu0
  %v278 = vadd.f32 %v82, %v277
  %v279 = vpop.f32.mrb[0].mxu0
  %v280 = vpop.f32.mrb[0].mxu0
  %v281 = vadd.f32 %v82, %v280
  %v282 = vpop.f32.mrb[0].mxu0
  %283 = vmatprep.mubr.bf16.mxu0 0
  %284 = vmatmul.mubr.bf16.gmra.mrb[0].mxu0 %v134
  %v285 = vpop.f32.mrb[0].mxu0
  %v286 = vadd.f32 %v82, %v285
  %v287 = vpop.f32.mrb[0].mxu0
  %v288 = vpop.f32.mrb[0].mxu0
  %v289 = vadd.f32 %v82, %v288
  %v290 = vpop.f32.mrb[0].mxu0
  %291 = vmatprep.mubr.bf16.mxu0 0
  %292 = vmatmul.mubr.bf16.gmra.mrb[0].mxu0 %v137
  %v293 = vpop.f32.mrb[0].mxu0
  %v294 = vadd.f32 %v82, %v293
  %v295 = vpop.f32.mrb[0].mxu0
  %v296 = vpop.f32.mrb[0].mxu0
  %v297 = vadd.f32 %v82, %v296
  %v298 = vpop.f32.mrb[0].mxu0
  %299 = vdwg.mxu0
  %v300 = vmul.f32 %v174, 0.1
  %v301 = vmul.f32 %v177, 0.1
  %v302 = vmul.f32 %v182, 0.1
  %v303 = vmul.f32 %v185, 0.1
  %v304 = vmul.f32 %v190, 0.1
  %v305 = vmul.f32 %v193, 0.1
  %v306 = vmul.f32 %v198, 0.1
  %v307 = vmul.f32 %v201, 0.1
  %v308 = vmul.f32 %v206, 0.1
  %v309 = vmul.f32 %v209, 0.1
  %v310 = vmul.f32 %v214, 0.1
  %v311 = vmul.f32 %v217, 0.1
  %v312 = vmul.f32 %v222, 0.1
  %v313 = vmul.f32 %v225, 0.1
  %v314 = vmul.f32 %v230, 0.1
  %v315 = vmul.f32 %v233, 0.1
  %v316 = vmul.f32 %v238, 0.1
  %v317 = vmul.f32 %v241, 0.1
  %v318 = vmul.f32 %v246, 0.1
  %v319 = vmul.f32 %v249, 0.1
  %v320 = vmul.f32 %v254, 0.1
  %v321 = vmul.f32 %v257, 0.1
  %v322 = vmul.f32 %v262, 0.1
  %v323 = vmul.f32 %v265, 0.1
  %v324 = vmul.f32 %v270, 0.1
  %v325 = vmul.f32 %v273, 0.1
  %v326 = vmul.f32 %v278, 0.1
  %v327 = vmul.f32 %v281, 0.1
  %v328 = vmul.f32 %v286, 0.1
  %v329 = vmul.f32 %v289, 0.1
  %v330 = vmul.f32 %v294, 0.1
  %v331 = vmul.f32 %v297, 0.1
  %v332 = vmax.f32 %v174, %v300
  %v333 = vmax.f32 %v177, %v301
  %v334 = vmax.f32 %v182, %v302
  %v335 = vmax.f32 %v185, %v303
  %v336 = vmax.f32 %v190, %v304
  %v337 = vmax.f32 %v193, %v305
  %v338 = vmax.f32 %v198, %v306
  %v339 = vmax.f32 %v201, %v307
  %v340 = vmax.f32 %v206, %v308
  %v341 = vmax.f32 %v209, %v309
  %v342 = vmax.f32 %v214, %v310
  %v343 = vmax.f32 %v217, %v311
  %v344 = vmax.f32 %v222, %v312
  %v345 = vmax.f32 %v225, %v313
  %v346 = vmax.f32 %v230, %v314
  %v347 = vmax.f32 %v233, %v315
  %v348 = vmax.f32 %v238, %v316
  %v349 = vmax.f32 %v241, %v317
  %v350 = vmax.f32 %v246, %v318
  %v351 = vmax.f32 %v249, %v319
  %v352 = vmax.f32 %v254, %v320
  %v353 = vmax.f32 %v257, %v321
  %v354 = vmax.f32 %v262, %v322
  %v355 = vmax.f32 %v265, %v323
  %v356 = vmax.f32 %v270, %v324
  %v357 = vmax.f32 %v273, %v325
  %v358 = vmax.f32 %v278, %v326
  %v359 = vmax.f32 %v281, %v327
  %v360 = vmax.f32 %v286, %v328
  %v361 = vmax.f32 %v289, %v329
  %v362 = vmax.f32 %v294, %v330
  %v363 = vmax.f32 %v297, %v331
  %v364 = vpack.c.bf16 %v333, %v332
  %v365 = vpack.c.bf16 %v335, %v334
  %v366 = vpack.c.bf16 %v337, %v336
  %v367 = vpack.c.bf16 %v339, %v338
  %v368 = vpack.c.bf16 %v341, %v340
  %v369 = vpack.c.bf16 %v343, %v342
  %v370 = vpack.c.bf16 %v345, %v344
  %v371 = vpack.c.bf16 %v347, %v346
  %v372 = vpack.c.bf16 %v349, %v348
  %v373 = vpack.c.bf16 %v351, %v350
  %v374 = vpack.c.bf16 %v353, %v352
  %v375 = vpack.c.bf16 %v355, %v354
  %v376 = vpack.c.bf16 %v357, %v356
  %v377 = vpack.c.bf16 %v359, %v358
  %v378 = vpack.c.bf16 %v361, %v360
  %v379 = vpack.c.bf16 %v363, %v362
  %v380 = vld [vmem:[%s3] sm:$0xf]
  %v381 = vld [vmem:[%s3 + $0x4] sm:$0xf]
  %v382 = vld [vmem:[%s3 + $0x8] sm:$0xf]
  %v383 = vld [vmem:[%s3 + $0xc] sm:$0xf]
  %v384 = vld [vmem:[%s3 + $0x10] sm:$0xf]
  %v385 = vld [vmem:[%s3 + $0x14] sm:$0xf]
  %v386 = vld [vmem:[%s3 + $0x18] sm:$0xf]
  %v387 = vld [vmem:[%s3 + $0x1c] sm:$0xf]
  %v388 = vld [vmem:[%s3 + $0x20] sm:$0xf]
  %v389 = vld [vmem:[%s3 + $0x24] sm:$0xf]
  %v390 = vld [vmem:[%s3 + $0x28] sm:$0xf]
  %v391 = vld [vmem:[%s3 + $0x2c] sm:$0xf]
  %v392 = vld [vmem:[%s3 + $0x30] sm:$0xf]
  %v393 = vld [vmem:[%s3 + $0x34] sm:$0xf]
  %v394 = vld [vmem:[%s3 + $0x38] sm:$0xf]
  %v395 = vld [vmem:[%s3 + $0x3c] sm:$0xf]
  %v396 = vld [vmem:[%s4] sm:$0x1]
  %v398 = vlaneseq
  %v399 = vshrl.u32 %v398, 7
  %v400 = vsub.s32 0, %v399
  %v401 = vrot.slane %v396, %v400
  %v419 = vunpack.c.l.b16 %v380
  %v420 = vunpack.c.l.b16 %v381
  %v421 = vunpack.c.l.b16 %v382
  %v422 = vunpack.c.l.b16 %v383
  %v423 = vunpack.c.l.b16 %v384
  %v424 = vunpack.c.l.b16 %v385
  %v425 = vunpack.c.l.b16 %v386
  %v426 = vunpack.c.l.b16 %v387
  %v427 = vunpack.c.l.b16 %v388
  %v428 = vunpack.c.l.b16 %v389
  %v429 = vunpack.c.l.b16 %v390
  %v430 = vunpack.c.l.b16 %v391
  %v431 = vunpack.c.l.b16 %v392
  %v432 = vunpack.c.l.b16 %v393
  %v433 = vunpack.c.l.b16 %v394
  %v434 = vunpack.c.l.b16 %v395
  %v435 = vpack.c.b16 %v420, %v419
  %v436 = vpack.c.b16 %v422, %v421
  %v437 = vpack.c.b16 %v424, %v423
  %v438 = vpack.c.b16 %v426, %v425
  %v439 = vpack.c.b16 %v428, %v427
  %v440 = vpack.c.b16 %v430, %v429
  %v441 = vpack.c.b16 %v432, %v431
  %v442 = vpack.c.b16 %v434, %v433
  %451 = vmatprep.subr.bf16.mxu0 0
  %452 = vmatpush1.bf16.msra.mxu0 %v435
  %453 = vmatprep.subr.bf16.mxu0 0
  %454 = vmatpush1.bf16.msra.mxu0 %v436
  %455 = vmatprep.subr.bf16.mxu0 0
  %456 = vmatpush1.bf16.msra.mxu0 %v437
  %457 = vmatprep.subr.bf16.mxu0 0
  %458 = vmatpush1.bf16.msra.mxu0 %v438
  %459 = vmatprep.subr.bf16.mxu0 0
  %460 = vmatpush1.bf16.msra.mxu0 %v439
  %461 = vmatprep.subr.bf16.mxu0 0
  %462 = vmatpush1.bf16.msra.mxu0 %v440
  %463 = vmatprep.subr.bf16.mxu0 0
  %464 = vmatpush1.bf16.msra.mxu0 %v441
  %465 = vmatprep.subr.bf16.mxu0 0
  %466 = vmatpush1.bf16.msra.mxu0 %v442
  %467 = vmatprep.subr.bf16.mxu0 0
  %468 = vmatpush1.bf16.msra.mxu0 0
  %469 = vmatprep.subr.bf16.mxu0 0
  %470 = vmatpush1.bf16.msra.mxu0 0
  %471 = vmatprep.subr.bf16.mxu0 0
  %472 = vmatpush1.bf16.msra.mxu0 0
  %473 = vmatprep.subr.bf16.mxu0 0
  %474 = vmatpush1.bf16.msra.mxu0 0
  %475 = vmatprep.subr.bf16.mxu0 0
  %476 = vmatpush1.bf16.msra.mxu0 0
  %477 = vmatprep.subr.bf16.mxu0 0
  %478 = vmatpush1.bf16.msra.mxu0 0
  %479 = vmatprep.subr.bf16.mxu0 0
  %480 = vmatpush1.bf16.msra.mxu0 0
  %481 = vmatprep.subr.bf16.mxu0 0
  %482 = vmatpush1.bf16.msra.mxu0 0
  %483 = vmatprep.mubr.bf16.mxu0 0
  %484 = vmatmul.mubr.bf16.gmra.mrb[0].mxu0 %v364
  %v485 = vpop.f32.mrb[0].mxu0
  %v486 = vadd.f32 %v401, %v485
  %v487 = vpop.f32.mrb[0].mxu0
  %v488 = vpop.f32.mrb[0].mxu0
  %v489 = vadd.f32 %v401, %v488
  %v490 = vpop.f32.mrb[0].mxu0
  %491 = vmatprep.mubr.bf16.mxu0 0
  %492 = vmatmul.mubr.bf16.gmra.mrb[0].mxu0 %v365
  %v493 = vpop.f32.mrb[0].mxu0
  %v494 = vadd.f32 %v401, %v493
  %v495 = vpop.f32.mrb[0].mxu0
  %v496 = vpop.f32.mrb[0].mxu0
  %v497 = vadd.f32 %v401, %v496
  %v498 = vpop.f32.mrb[0].mxu0
  %499 = vmatprep.mubr.bf16.mxu0 0
  %500 = vmatmul.mubr.bf16.gmra.mrb[0].mxu0 %v366
  %v501 = vpop.f32.mrb[0].mxu0
  %v502 = vadd.f32 %v401, %v501
  %v503 = vpop.f32.mrb[0].mxu0
  %v504 = vpop.f32.mrb[0].mxu0
  %v505 = vadd.f32 %v401, %v504
  %v506 = vpop.f32.mrb[0].mxu0
  %507 = vmatprep.mubr.bf16.mxu0 0
  %508 = vmatmul.mubr.bf16.gmra.mrb[0].mxu0 %v367
  %v509 = vpop.f32.mrb[0].mxu0
  %v510 = vadd.f32 %v401, %v509
  %v511 = vpop.f32.mrb[0].mxu0
  %v512 = vpop.f32.mrb[0].mxu0
  %v513 = vadd.f32 %v401, %v512
  %v514 = vpop.f32.mrb[0].mxu0
  %515 = vmatprep.mubr.bf16.mxu0 0
  %516 = vmatmul.mubr.bf16.gmra.mrb[0].mxu0 %v368
  %v517 = vpop.f32.mrb[0].mxu0
  %v518 = vadd.f32 %v401, %v517
  %v519 = vpop.f32.mrb[0].mxu0
  %v520 = vpop.f32.mrb[0].mxu0
  %v521 = vadd.f32 %v401, %v520
  %v522 = vpop.f32.mrb[0].mxu0
  %523 = vmatprep.mubr.bf16.mxu0 0
  %524 = vmatmul.mubr.bf16.gmra.mrb[0].mxu0 %v369
  %v525 = vpop.f32.mrb[0].mxu0
  %v526 = vadd.f32 %v401, %v525
  %v527 = vpop.f32.mrb[0].mxu0
  %v528 = vpop.f32.mrb[0].mxu0
  %v529 = vadd.f32 %v401, %v528
  %v530 = vpop.f32.mrb[0].mxu0
  %531 = vmatprep.mubr.bf16.mxu0 0
  %532 = vmatmul.mubr.bf16.gmra.mrb[0].mxu0 %v370
  %v533 = vpop.f32.mrb[0].mxu0
  %v534 = vadd.f32 %v401, %v533
  %v535 = vpop.f32.mrb[0].mxu0
  %v536 = vpop.f32.mrb[0].mxu0
  %v537 = vadd.f32 %v401, %v536
  %v538 = vpop.f32.mrb[0].mxu0
  %539 = vmatprep.mubr.bf16.mxu0 0
  %540 = vmatmul.mubr.bf16.gmra.mrb[0].mxu0 %v371
  %v541 = vpop.f32.mrb[0].mxu0
  %v542 = vadd.f32 %v401, %v541
  %v543 = vpop.f32.mrb[0].mxu0
  %v544 = vpop.f32.mrb[0].mxu0
  %v545 = vadd.f32 %v401, %v544
  %v546 = vpop.f32.mrb[0].mxu0
  %547 = vmatprep.mubr.bf16.mxu0 0
  %548 = vmatmul.mubr.bf16.gmra.mrb[0].mxu0 %v372
  %v549 = vpop.f32.mrb[0].mxu0
  %v550 = vadd.f32 %v401, %v549
  %v551 = vpop.f32.mrb[0].mxu0
  %v552 = vpop.f32.mrb[0].mxu0
  %v553 = vadd.f32 %v401, %v552
  %v554 = vpop.f32.mrb[0].mxu0
  %555 = vmatprep.mubr.bf16.mxu0 0
  %556 = vmatmul.mubr.bf16.gmra.mrb[0].mxu0 %v373
  %v557 = vpop.f32.mrb[0].mxu0
  %v558 = vadd.f32 %v401, %v557
  %v559 = vpop.f32.mrb[0].mxu0
  %v560 = vpop.f32.mrb[0].mxu0
  %v561 = vadd.f32 %v401, %v560
  %v562 = vpop.f32.mrb[0].mxu0
  %563 = vmatprep.mubr.bf16.mxu0 0
  %564 = vmatmul.mubr.bf16.gmra.mrb[0].mxu0 %v374
  %v565 = vpop.f32.mrb[0].mxu0
  %v566 = vadd.f32 %v401, %v565
  %v567 = vpop.f32.mrb[0].mxu0
  %v568 = vpop.f32.mrb[0].mxu0
  %v569 = vadd.f32 %v401, %v568
  %v570 = vpop.f32.mrb[0].mxu0
  %571 = vmatprep.mubr.bf16.mxu0 0
  %572 = vmatmul.mubr.bf16.gmra.mrb[0].mxu0 %v375
  %v573 = vpop.f32.mrb[0].mxu0
  %v574 = vadd.f32 %v401, %v573
  %v575 = vpop.f32.mrb[0].mxu0
  %v576 = vpop.f32.mrb[0].mxu0
  %v577 = vadd.f32 %v401, %v576
  %v578 = vpop.f32.mrb[0].mxu0
  %579 = vmatprep.mubr.bf16.mxu0 0
  %580 = vmatmul.mubr.bf16.gmra.mrb[0].mxu0 %v376
  %v581 = vpop.f32.mrb[0].mxu0
  %v582 = vadd.f32 %v401, %v581
  %v583 = vpop.f32.mrb[0].mxu0
  %v584 = vpop.f32.mrb[0].mxu0
  %v585 = vadd.f32 %v401, %v584
  %v586 = vpop.f32.mrb[0].mxu0
  %587 = vmatprep.mubr.bf16.mxu0 0
  %588 = vmatmul.mubr.bf16.gmra.mrb[0].mxu0 %v377
  %v589 = vpop.f32.mrb[0].mxu0
  %v590 = vadd.f32 %v401, %v589
  %v591 = vpop.f32.mrb[0].mxu0
  %v592 = vpop.f32.mrb[0].mxu0
  %v593 = vadd.f32 %v401, %v592
  %v594 = vpop.f32.mrb[0].mxu0
  %595 = vmatprep.mubr.bf16.mxu0 0
  %596 = vmatmul.mubr.bf16.gmra.mrb[0].mxu0 %v378
  %v597 = vpop.f32.mrb[0].mxu0
  %v598 = vadd.f32 %v401, %v597
  %v599 = vpop.f32.mrb[0].mxu0
  %v600 = vpop.f32.mrb[0].mxu0
  %v601 = vadd.f32 %v401, %v600
  %v602 = vpop.f32.mrb[0].mxu0
  %603 = vmatprep.mubr.bf16.mxu0 0
  %604 = vmatmul.mubr.bf16.gmra.mrb[0].mxu0 %v379
  %v605 = vpop.f32.mrb[0].mxu0
  %v606 = vadd.f32 %v401, %v605
  %v607 = vpop.f32.mrb[0].mxu0
  %v608 = vpop.f32.mrb[0].mxu0
  %v609 = vadd.f32 %v401, %v608
  %v610 = vpop.f32.mrb[0].mxu0
  %611 = vdwg.mxu0
  %v612 = vmul.f32 %v486, 0.1
  %v613 = vmul.f32 %v489, 0.1
  %v614 = vmul.f32 %v494, 0.1
  %v615 = vmul.f32 %v497, 0.1
  %v616 = vmul.f32 %v502, 0.1
  %v617 = vmul.f32 %v505, 0.1
  %v618 = vmul.f32 %v510, 0.1
  %v619 = vmul.f32 %v513, 0.1
  %v620 = vmul.f32 %v518, 0.1
  %v621 = vmul.f32 %v521, 0.1
  %v622 = vmul.f32 %v526, 0.1
  %v623 = vmul.f32 %v529, 0.1
  %v624 = vmul.f32 %v534, 0.1
  %v625 = vmul.f32 %v537, 0.1
  %v626 = vmul.f32 %v542, 0.1
  %v627 = vmul.f32 %v545, 0.1
  %v628 = vmul.f32 %v550, 0.1
  %v629 = vmul.f32 %v553, 0.1
  %v630 = vmul.f32 %v558, 0.1
  %v631 = vmul.f32 %v561, 0.1
  %v632 = vmul.f32 %v566, 0.1
  %v633 = vmul.f32 %v569, 0.1
  %v634 = vmul.f32 %v574, 0.1
  %v635 = vmul.f32 %v577, 0.1
  %v636 = vmul.f32 %v582, 0.1
  %v637 = vmul.f32 %v585, 0.1
  %v638 = vmul.f32 %v590, 0.1
  %v639 = vmul.f32 %v593, 0.1
  %v640 = vmul.f32 %v598, 0.1
  %v641 = vmul.f32 %v601, 0.1
  %v642 = vmul.f32 %v606, 0.1
  %v643 = vmul.f32 %v609, 0.1
  %v644 = vmax.f32 %v486, %v612
  %v645 = vmax.f32 %v489, %v613
  %v646 = vmax.f32 %v494, %v614
  %v647 = vmax.f32 %v497, %v615
  %v648 = vmax.f32 %v502, %v616
  %v649 = vmax.f32 %v505, %v617
  %v650 = vmax.f32 %v510, %v618
  %v651 = vmax.f32 %v513, %v619
  %v652 = vmax.f32 %v518, %v620
  %v653 = vmax.f32 %v521, %v621
  %v654 = vmax.f32 %v526, %v622
  %v655 = vmax.f32 %v529, %v623
  %v656 = vmax.f32 %v534, %v624
  %v657 = vmax.f32 %v537, %v625
  %v658 = vmax.f32 %v542, %v626
  %v659 = vmax.f32 %v545, %v627
  %v660 = vmax.f32 %v550, %v628
  %v661 = vmax.f32 %v553, %v629
  %v662 = vmax.f32 %v558, %v630
  %v663 = vmax.f32 %v561, %v631
  %v664 = vmax.f32 %v566, %v632
  %v665 = vmax.f32 %v569, %v633
  %v666 = vmax.f32 %v574, %v634
  %v667 = vmax.f32 %v577, %v635
  %v668 = vmax.f32 %v582, %v636
  %v669 = vmax.f32 %v585, %v637
  %v670 = vmax.f32 %v590, %v638
  %v671 = vmax.f32 %v593, %v639
  %v672 = vmax.f32 %v598, %v640
  %v673 = vmax.f32 %v601, %v641
  %v674 = vmax.f32 %v606, %v642
  %v675 = vmax.f32 %v609, %v643
  %v676 = vpack.c.bf16 %v645, %v644
  %v677 = vpack.c.bf16 %v647, %v646
  %v678 = vpack.c.bf16 %v649, %v648
  %v679 = vpack.c.bf16 %v651, %v650
  %v680 = vpack.c.bf16 %v653, %v652
  %v681 = vpack.c.bf16 %v655, %v654
  %v682 = vpack.c.bf16 %v657, %v656
  %v683 = vpack.c.bf16 %v659, %v658
  %v684 = vpack.c.bf16 %v661, %v660
  %v685 = vpack.c.bf16 %v663, %v662
  %v686 = vpack.c.bf16 %v665, %v664
  %v687 = vpack.c.bf16 %v667, %v666
  %v688 = vpack.c.bf16 %v669, %v668
  %v689 = vpack.c.bf16 %v671, %v670
  %v690 = vpack.c.bf16 %v673, %v672
  %v691 = vpack.c.bf16 %v675, %v674
  %v692 = vld [vmem:[%s5] sm:$0xf]
  %v693 = vld [vmem:[%s5 + $0x4] sm:$0xf]
  %v694 = vld [vmem:[%s5 + $0x8] sm:$0xf]
  %v695 = vld [vmem:[%s5 + $0xc] sm:$0xf]
  %v696 = vld [vmem:[%s5 + $0x10] sm:$0xf]
  %v697 = vld [vmem:[%s5 + $0x14] sm:$0xf]
  %v698 = vld [vmem:[%s5 + $0x18] sm:$0xf]
  %v699 = vld [vmem:[%s5 + $0x1c] sm:$0xf]
  %v700 = vld [vmem:[%s5 + $0x20] sm:$0xf]
  %v701 = vld [vmem:[%s5 + $0x24] sm:$0xf]
  %v702 = vld [vmem:[%s5 + $0x28] sm:$0xf]
  %v703 = vld [vmem:[%s5 + $0x2c] sm:$0xf]
  %v704 = vld [vmem:[%s5 + $0x30] sm:$0xf]
  %v705 = vld [vmem:[%s5 + $0x34] sm:$0xf]
  %v706 = vld [vmem:[%s5 + $0x38] sm:$0xf]
  %v707 = vld [vmem:[%s5 + $0x3c] sm:$0xf]
  %v708 = vld [vmem:[%s6] sm:$0x1]
  %v710 = vlaneseq
  %v711 = vshrl.u32 %v710, 7
  %v712 = vsub.s32 0, %v711
  %v713 = vrot.slane %v708, %v712
  %v731 = vunpack.c.l.b16 %v692
  %v732 = vunpack.c.l.b16 %v693
  %v733 = vunpack.c.l.b16 %v694
  %v734 = vunpack.c.l.b16 %v695
  %v735 = vunpack.c.l.b16 %v696
  %v736 = vunpack.c.l.b16 %v697
  %v737 = vunpack.c.l.b16 %v698
  %v738 = vunpack.c.l.b16 %v699
  %v739 = vunpack.c.l.b16 %v700
  %v740 = vunpack.c.l.b16 %v701
  %v741 = vunpack.c.l.b16 %v702
  %v742 = vunpack.c.l.b16 %v703
  %v743 = vunpack.c.l.b16 %v704
  %v744 = vunpack.c.l.b16 %v705
  %v745 = vunpack.c.l.b16 %v706
  %v746 = vunpack.c.l.b16 %v707
  %v747 = vpack.c.b16 %v732, %v731
  %v748 = vpack.c.b16 %v734, %v733
  %v749 = vpack.c.b16 %v736, %v735
  %v750 = vpack.c.b16 %v738, %v737
  %v751 = vpack.c.b16 %v740, %v739
  %v752 = vpack.c.b16 %v742, %v741
  %v753 = vpack.c.b16 %v744, %v743
  %v754 = vpack.c.b16 %v746, %v745
  %763 = vmatprep.subr.bf16.mxu0 0
  %764 = vmatpush1.bf16.msra.mxu0 %v747
  %765 = vmatprep.subr.bf16.mxu0 0
  %766 = vmatpush1.bf16.msra.mxu0 %v748
  %767 = vmatprep.subr.bf16.mxu0 0
  %768 = vmatpush1.bf16.msra.mxu0 %v749
  %769 = vmatprep.subr.bf16.mxu0 0
  %770 = vmatpush1.bf16.msra.mxu0 %v750
  %771 = vmatprep.subr.bf16.mxu0 0
  %772 = vmatpush1.bf16.msra.mxu0 %v751
  %773 = vmatprep.subr.bf16.mxu0 0
  %774 = vmatpush1.bf16.msra.mxu0 %v752
  %775 = vmatprep.subr.bf16.mxu0 0
  %776 = vmatpush1.bf16.msra.mxu0 %v753
  %777 = vmatprep.subr.bf16.mxu0 0
  %778 = vmatpush1.bf16.msra.mxu0 %v754
  %779 = vmatprep.subr.bf16.mxu0 0
  %780 = vmatpush1.bf16.msra.mxu0 0
  %781 = vmatprep.subr.bf16.mxu0 0
  %782 = vmatpush1.bf16.msra.mxu0 0
  %783 = vmatprep.subr.bf16.mxu0 0
  %784 = vmatpush1.bf16.msra.mxu0 0
  %785 = vmatprep.subr.bf16.mxu0 0
  %786 = vmatpush1.bf16.msra.mxu0 0
  %787 = vmatprep.subr.bf16.mxu0 0
  %788 = vmatpush1.bf16.msra.mxu0 0
  %789 = vmatprep.subr.bf16.mxu0 0
  %790 = vmatpush1.bf16.msra.mxu0 0
  %791 = vmatprep.subr.bf16.mxu0 0
  %792 = vmatpush1.bf16.msra.mxu0 0
  %793 = vmatprep.subr.bf16.mxu0 0
  %794 = vmatpush1.bf16.msra.mxu0 0
  %795 = vmatprep.mubr.bf16.mxu0 0
  %796 = vmatmul.mubr.bf16.gmra.mrb[0].mxu0 %v676
  %v797 = vpop.f32.mrb[0].mxu0
  %v798 = vadd.f32 %v713, %v797
  %v799 = vpop.f32.mrb[0].mxu0
  %v800 = vpop.f32.mrb[0].mxu0
  %v801 = vadd.f32 %v713, %v800
  %v802 = vpop.f32.mrb[0].mxu0
  %803 = vmatprep.mubr.bf16.mxu0 0
  %804 = vmatmul.mubr.bf16.gmra.mrb[0].mxu0 %v677
  %v805 = vpop.f32.mrb[0].mxu0
  %v806 = vadd.f32 %v713, %v805
  %v807 = vpop.f32.mrb[0].mxu0
  %v808 = vpop.f32.mrb[0].mxu0
  %v809 = vadd.f32 %v713, %v808
  %v810 = vpop.f32.mrb[0].mxu0
  %811 = vmatprep.mubr.bf16.mxu0 0
  %812 = vmatmul.mubr.bf16.gmra.mrb[0].mxu0 %v678
  %v813 = vpop.f32.mrb[0].mxu0
  %v814 = vadd.f32 %v713, %v813
  %v815 = vpop.f32.mrb[0].mxu0
  %v816 = vpop.f32.mrb[0].mxu0
  %v817 = vadd.f32 %v713, %v816
  %v818 = vpop.f32.mrb[0].mxu0
  %819 = vmatprep.mubr.bf16.mxu0 0
  %820 = vmatmul.mubr.bf16.gmra.mrb[0].mxu0 %v679
  %v821 = vpop.f32.mrb[0].mxu0
  %v822 = vadd.f32 %v713, %v821
  %v823 = vpop.f32.mrb[0].mxu0
  %v824 = vpop.f32.mrb[0].mxu0
  %v825 = vadd.f32 %v713, %v824
  %v826 = vpop.f32.mrb[0].mxu0
  %827 = vmatprep.mubr.bf16.mxu0 0
  %828 = vmatmul.mubr.bf16.gmra.mrb[0].mxu0 %v680
  %v829 = vpop.f32.mrb[0].mxu0
  %v830 = vadd.f32 %v713, %v829
  %v831 = vpop.f32.mrb[0].mxu0
  %v832 = vpop.f32.mrb[0].mxu0
  %v833 = vadd.f32 %v713, %v832
  %v834 = vpop.f32.mrb[0].mxu0
  %835 = vmatprep.mubr.bf16.mxu0 0
  %836 = vmatmul.mubr.bf16.gmra.mrb[0].mxu0 %v681
  %v837 = vpop.f32.mrb[0].mxu0
  %v838 = vadd.f32 %v713, %v837
  %v839 = vpop.f32.mrb[0].mxu0
  %v840 = vpop.f32.mrb[0].mxu0
  %v841 = vadd.f32 %v713, %v840
  %v842 = vpop.f32.mrb[0].mxu0
  %843 = vmatprep.mubr.bf16.mxu0 0
  %844 = vmatmul.mubr.bf16.gmra.mrb[0].mxu0 %v682
  %v845 = vpop.f32.mrb[0].mxu0
  %v846 = vadd.f32 %v713, %v845
  %v847 = vpop.f32.mrb[0].mxu0
  %v848 = vpop.f32.mrb[0].mxu0
  %v849 = vadd.f32 %v713, %v848
  %v850 = vpop.f32.mrb[0].mxu0
  %851 = vmatprep.mubr.bf16.mxu0 0
  %852 = vmatmul.mubr.bf16.gmra.mrb[0].mxu0 %v683
  %v853 = vpop.f32.mrb[0].mxu0
  %v854 = vadd.f32 %v713, %v853
  %v855 = vpop.f32.mrb[0].mxu0
  %v856 = vpop.f32.mrb[0].mxu0
  %v857 = vadd.f32 %v713, %v856
  %v858 = vpop.f32.mrb[0].mxu0
  %859 = vmatprep.mubr.bf16.mxu0 0
  %860 = vmatmul.mubr.bf16.gmra.mrb[0].mxu0 %v684
  %v861 = vpop.f32.mrb[0].mxu0
  %v862 = vadd.f32 %v713, %v861
  %v863 = vpop.f32.mrb[0].mxu0
  %v864 = vpop.f32.mrb[0].mxu0
  %v865 = vadd.f32 %v713, %v864
  %v866 = vpop.f32.mrb[0].mxu0
  %867 = vmatprep.mubr.bf16.mxu0 0
  %868 = vmatmul.mubr.bf16.gmra.mrb[0].mxu0 %v685
  %v869 = vpop.f32.mrb[0].mxu0
  %v870 = vadd.f32 %v713, %v869
  %v871 = vpop.f32.mrb[0].mxu0
  %v872 = vpop.f32.mrb[0].mxu0
  %v873 = vadd.f32 %v713, %v872
  %v874 = vpop.f32.mrb[0].mxu0
  %875 = vmatprep.mubr.bf16.mxu0 0
  %876 = vmatmul.mubr.bf16.gmra.mrb[0].mxu0 %v686
  %v877 = vpop.f32.mrb[0].mxu0
  %v878 = vadd.f32 %v713, %v877
  %v879 = vpop.f32.mrb[0].mxu0
  %v880 = vpop.f32.mrb[0].mxu0
  %v881 = vadd.f32 %v713, %v880
  %v882 = vpop.f32.mrb[0].mxu0
  %883 = vmatprep.mubr.bf16.mxu0 0
  %884 = vmatmul.mubr.bf16.gmra.mrb[0].mxu0 %v687
  %v885 = vpop.f32.mrb[0].mxu0
  %v886 = vadd.f32 %v713, %v885
  %v887 = vpop.f32.mrb[0].mxu0
  %v888 = vpop.f32.mrb[0].mxu0
  %v889 = vadd.f32 %v713, %v888
  %v890 = vpop.f32.mrb[0].mxu0
  %891 = vmatprep.mubr.bf16.mxu0 0
  %892 = vmatmul.mubr.bf16.gmra.mrb[0].mxu0 %v688
  %v893 = vpop.f32.mrb[0].mxu0
  %v894 = vadd.f32 %v713, %v893
  %v895 = vpop.f32.mrb[0].mxu0
  %v896 = vpop.f32.mrb[0].mxu0
  %v897 = vadd.f32 %v713, %v896
  %v898 = vpop.f32.mrb[0].mxu0
  %899 = vmatprep.mubr.bf16.mxu0 0
  %900 = vmatmul.mubr.bf16.gmra.mrb[0].mxu0 %v689
  %v901 = vpop.f32.mrb[0].mxu0
  %v902 = vadd.f32 %v713, %v901
  %v903 = vpop.f32.mrb[0].mxu0
  %v904 = vpop.f32.mrb[0].mxu0
  %v905 = vadd.f32 %v713, %v904
  %v906 = vpop.f32.mrb[0].mxu0
  %907 = vmatprep.mubr.bf16.mxu0 0
  %908 = vmatmul.mubr.bf16.gmra.mrb[0].mxu0 %v690
  %v909 = vpop.f32.mrb[0].mxu0
  %v910 = vadd.f32 %v713, %v909
  %v911 = vpop.f32.mrb[0].mxu0
  %v912 = vpop.f32.mrb[0].mxu0
  %v913 = vadd.f32 %v713, %v912
  %v914 = vpop.f32.mrb[0].mxu0
  %915 = vmatprep.mubr.bf16.mxu0 0
  %916 = vmatmul.mubr.bf16.gmra.mrb[0].mxu0 %v691
  %v917 = vpop.f32.mrb[0].mxu0
  %v918 = vadd.f32 %v713, %v917
  %v919 = vpop.f32.mrb[0].mxu0
  %v920 = vpop.f32.mrb[0].mxu0
  %v921 = vadd.f32 %v713, %v920
  %v922 = vpop.f32.mrb[0].mxu0
  %923 = vdwg.mxu0
  %v924 = vtanh.pop %v798
  %v925 = vtanh.pop %v801
  %v926 = vtanh.pop %v806
  %v927 = vtanh.pop %v809
  %v928 = vtanh.pop %v814
  %v929 = vtanh.pop %v817
  %v930 = vtanh.pop %v822
  %v931 = vtanh.pop %v825
  %v932 = vtanh.pop %v830
  %v933 = vtanh.pop %v833
  %v934 = vtanh.pop %v838
  %v935 = vtanh.pop %v841
  %v936 = vtanh.pop %v846
  %v937 = vtanh.pop %v849
  %v938 = vtanh.pop %v854
  %v939 = vtanh.pop %v857
  %v940 = vtanh.pop %v862
  %v941 = vtanh.pop %v865
  %v942 = vtanh.pop %v870
  %v943 = vtanh.pop %v873
  %v944 = vtanh.pop %v878
  %v945 = vtanh.pop %v881
  %v946 = vtanh.pop %v886
  %v947 = vtanh.pop %v889
  %v948 = vtanh.pop %v894
  %v949 = vtanh.pop %v897
  %v950 = vtanh.pop %v902
  %v951 = vtanh.pop %v905
  %v952 = vtanh.pop %v910
  %v953 = vtanh.pop %v913
  %v954 = vtanh.pop %v918
  %v955 = vtanh.pop %v921
  %v956 = vpack.c.bf16 %v925, %v924
  %v957 = vpack.c.bf16 %v927, %v926
  %v958 = vpack.c.bf16 %v929, %v928
  %v959 = vpack.c.bf16 %v931, %v930
  %v960 = vpack.c.bf16 %v933, %v932
  %v961 = vpack.c.bf16 %v935, %v934
  %v962 = vpack.c.bf16 %v937, %v936
  %v963 = vpack.c.bf16 %v939, %v938
  %v964 = vpack.c.bf16 %v941, %v940
  %v965 = vpack.c.bf16 %v943, %v942
  %v966 = vpack.c.bf16 %v945, %v944
  %v967 = vpack.c.bf16 %v947, %v946
  %v968 = vpack.c.bf16 %v949, %v948
  %v969 = vpack.c.bf16 %v951, %v950
  %v970 = vpack.c.bf16 %v953, %v952
  %v971 = vpack.c.bf16 %v955, %v954
  %v988 = vunpack.c.l.b16 %v956
  %v989 = vunpack.c.h.b16 %v956
  %v990 = vunpack.c.l.b16 %v957
  %v991 = vunpack.c.h.b16 %v957
  %v992 = vunpack.c.l.b16 %v958
  %v993 = vunpack.c.h.b16 %v958
  %v994 = vunpack.c.l.b16 %v959
  %v995 = vunpack.c.h.b16 %v959
  %v996 = vunpack.c.l.b16 %v960
  %v997 = vunpack.c.h.b16 %v960
  %v998 = vunpack.c.l.b16 %v961
  %v999 = vunpack.c.h.b16 %v961
  %v1000 = vunpack.c.l.b16 %v962
  %v1001 = vunpack.c.h.b16 %v962
  %v1002 = vunpack.c.l.b16 %v963
  %v1003 = vunpack.c.h.b16 %v963
  %v1004 = vunpack.c.l.b16 %v964
  %v1005 = vunpack.c.h.b16 %v964
  %v1006 = vunpack.c.l.b16 %v965
  %v1007 = vunpack.c.h.b16 %v965
  %v1008 = vunpack.c.l.b16 %v966
  %v1009 = vunpack.c.h.b16 %v966
  %v1010 = vunpack.c.l.b16 %v967
  %v1011 = vunpack.c.h.b16 %v967
  %v1012 = vunpack.c.l.b16 %v968
  %v1013 = vunpack.c.h.b16 %v968
  %v1014 = vunpack.c.l.b16 %v969
  %v1015 = vunpack.c.h.b16 %v969
  %v1016 = vunpack.c.l.b16 %v970
  %v1017 = vunpack.c.h.b16 %v970
  %v1018 = vunpack.c.l.b16 %v971
  %v1019 = vunpack.c.h.b16 %v971
  %v1020 = vpack.c.b16 %v988, %v988
  %v1021 = vpack.c.b16 %v989, %v989
  %v1022 = vpack.c.b16 %v990, %v990
  %v1023 = vpack.c.b16 %v991, %v991
  %v1024 = vpack.c.b16 %v992, %v992
  %v1025 = vpack.c.b16 %v993, %v993
  %v1026 = vpack.c.b16 %v994, %v994
  %v1027 = vpack.c.b16 %v995, %v995
  %v1028 = vpack.c.b16 %v996, %v996
  %v1029 = vpack.c.b16 %v997, %v997
  %v1030 = vpack.c.b16 %v998, %v998
  %v1031 = vpack.c.b16 %v999, %v999
  %v1032 = vpack.c.b16 %v1000, %v1000
  %v1033 = vpack.c.b16 %v1001, %v1001
  %v1034 = vpack.c.b16 %v1002, %v1002
  %v1035 = vpack.c.b16 %v1003, %v1003
  %v1036 = vpack.c.b16 %v1004, %v1004
  %v1037 = vpack.c.b16 %v1005, %v1005
  %v1038 = vpack.c.b16 %v1006, %v1006
  %v1039 = vpack.c.b16 %v1007, %v1007
  %v1040 = vpack.c.b16 %v1008, %v1008
  %v1041 = vpack.c.b16 %v1009, %v1009
  %v1042 = vpack.c.b16 %v1010, %v1010
  %v1043 = vpack.c.b16 %v1011, %v1011
  %v1044 = vpack.c.b16 %v1012, %v1012
  %v1045 = vpack.c.b16 %v1013, %v1013
  %v1046 = vpack.c.b16 %v1014, %v1014
  %v1047 = vpack.c.b16 %v1015, %v1015
  %v1048 = vpack.c.b16 %v1016, %v1016
  %v1049 = vpack.c.b16 %v1017, %v1017
  %v1050 = vpack.c.b16 %v1018, %v1018
  %v1051 = vpack.c.b16 %v1019, %v1019
  %1084 = vst [vmem:[%s7] sm:$0xf] %v1020
  %1085 = vst [vmem:[%s7 + $0x4] sm:$0xf] %v1021
  %1086 = vst [vmem:[%s7 + $0x8] sm:$0xf] %v1022
  %1087 = vst [vmem:[%s7 + $0xc] sm:$0xf] %v1023
  %1088 = vst [vmem:[%s7 + $0x10] sm:$0xf] %v1024
  %1089 = vst [vmem:[%s7 + $0x14] sm:$0xf] %v1025
  %1090 = vst [vmem:[%s7 + $0x18] sm:$0xf] %v1026
  %1091 = vst [vmem:[%s7 + $0x1c] sm:$0xf] %v1027
  %1092 = vst [vmem:[%s7 + $0x20] sm:$0xf] %v1028
  %1093 = vst [vmem:[%s7 + $0x24] sm:$0xf] %v1029
  %1094 = vst [vmem:[%s7 + $0x28] sm:$0xf] %v1030
  %1095 = vst [vmem:[%s7 + $0x2c] sm:$0xf] %v1031
  %1096 = vst [vmem:[%s7 + $0x30] sm:$0xf] %v1032
  %1097 = vst [vmem:[%s7 + $0x34] sm:$0xf] %v1033
  %1098 = vst [vmem:[%s7 + $0x38] sm:$0xf] %v1034
  %1099 = vst [vmem:[%s7 + $0x3c] sm:$0xf] %v1035
  %1100 = vst [vmem:[%s7 + $0x40] sm:$0xf] %v1036
  %1101 = vst [vmem:[%s7 + $0x44] sm:$0xf] %v1037
  %1102 = vst [vmem:[%s7 + $0x48] sm:$0xf] %v1038
  %1103 = vst [vmem:[%s7 + $0x4c] sm:$0xf] %v1039
  %1104 = vst [vmem:[%s7 + $0x50] sm:$0xf] %v1040
  %1105 = vst [vmem:[%s7 + $0x54] sm:$0xf] %v1041
  %1106 = vst [vmem:[%s7 + $0x58] sm:$0xf] %v1042
  %1107 = vst [vmem:[%s7 + $0x5c] sm:$0xf] %v1043
  %1108 = vst [vmem:[%s7 + $0x60] sm:$0xf] %v1044
  %1109 = vst [vmem:[%s7 + $0x64] sm:$0xf] %v1045
  %1110 = vst [vmem:[%s7 + $0x68] sm:$0xf] %v1046
  %1111 = vst [vmem:[%s7 + $0x6c] sm:$0xf] %v1047
  %1112 = vst [vmem:[%s7 + $0x70] sm:$0xf] %v1048
  %1113 = vst [vmem:[%s7 + $0x74] sm:$0xf] %v1049
  %1114 = vst [vmem:[%s7 + $0x78] sm:$0xf] %v1050
  %1115 = vst [vmem:[%s7 + $0x7c] sm:$0xf] %v1051
  // Predicated region
  $region30: #{generator_forward.1} parent=0 // pred_check
    _
  $region31: #{generator_forward.1} parent=0 // pred_check_branch
    %1117 = sbr.rel (0) target = $region33
  $region32: #{generator_forward.1} parent=0 // pred_region
    _
  $region33: #{generator_forward.1} parent=0 // pred_fallthru
    _
  // Predicated region
  $region34: #{generator_forward.1} parent=0 // pred_check
    _
  $region35: #{generator_forward.1} parent=0 // pred_check_branch
    %1119 = sbr.rel (0) target = $region37
  $region36: #{generator_forward.1} parent=0 // pred_region
    _
  $region37: #{generator_forward.1} parent=0 // pred_fallthru
    _

// kernel: generator_forward.1
$region0: #{generator_forward.1}
  #allocation0 [shape = 'u32[]', space=smem, size = 0x4, offset = 0x4, fixed_abs, tag = 'smem constant byte address 0x4 - core index']
  #allocation1 [shape = 'u32[144,128]{1,0:T(1,128)}', space=vmem, size = 0x12000, scoped, tag = 'internal scratch']
  %s0 = inlined_call_operand.vmem [shape: f32[256,16], index: 0, kind: input, shape index: {}]
  %s1 = inlined_call_operand.vmem [shape: bf16[16,128], index: 1, kind: input, shape index: {}]
  %s2 = inlined_call_operand.vmem [shape: f32[1,128], index: 2, kind: input, shape index: {}]
  %s3 = inlined_call_operand.vmem [shape: bf16[128,128], index: 3, kind: input, shape index: {}]
  %s4 = inlined_call_operand.vmem [shape: f32[1,128], index: 4, kind: input, shape index: {}]
  %s5 = inlined_call_operand.vmem [shape: bf16[128,128], index: 5, kind: input, shape index: {}]
  %s6 = inlined_call_operand.vmem [shape: f32[1,128], index: 6, kind: input, shape index: {}]
  %s7 = inlined_call_operand.vmem [shape: bf16[256,128], index: 7, kind: output, shape index: {}]
  %s8 = sld [smem:[#allocation0]]
  $region38: #{generator_forward.1} parent=0
    _
  %s10 = ssub.s32 1, %s8
  %s11 = scalar_select 0, %s10, %s8
  // Predicated region
  $region2: #{generator_forward.1} parent=0 // pred_check
    _
  $region3: #{generator_forward.1} parent=0 // pred_check_branch
    %13 = sbr.rel (0) target = $region5
  $region4: #{generator_forward.1} parent=0 // pred_region
    _
  $region5: #{generator_forward.1} parent=0 // pred_fallthru
    _
  // Predicated region
  $region6: #{generator_forward.1} parent=0 // pred_check
    _
  $region7: #{generator_forward.1} parent=0 // pred_check_branch
    %15 = sbr.rel (0) target = $region9
  $region8: #{generator_forward.1} parent=0 // pred_region
    _
  $region9: #{generator_forward.1} parent=0 // pred_fallthru
    _
  // Predicated region
  $region10: #{generator_forward.1} parent=0 // pred_check
    _
  $region11: #{generator_forward.1} parent=0 // pred_check_branch
    %17 = sbr.rel (0) target = $region13
  $region12: #{generator_forward.1} parent=0 // pred_region
    _
  $region13: #{generator_forward.1} parent=0 // pred_fallthru
    _
  // Predicated region
  $region14: #{generator_forward.1} parent=0 // pred_check
    _
  $region15: #{generator_forward.1} parent=0 // pred_check_branch
    %19 = sbr.rel (0) target = $region17
  $region16: #{generator_forward.1} parent=0 // pred_region
    _
  $region17: #{generator_forward.1} parent=0 // pred_fallthru
    _
  // Predicated region
  $region18: #{generator_forward.1} parent=0 // pred_check
    _
  $region19: #{generator_forward.1} parent=0 // pred_check_branch
    %21 = sbr.rel (0) target = $region21
  $region20: #{generator_forward.1} parent=0 // pred_region
    _
  $region21: #{generator_forward.1} parent=0 // pred_fallthru
    _
  // Predicated region
  $region22: #{generator_forward.1} parent=0 // pred_check
    _
  $region23: #{generator_forward.1} parent=0 // pred_check_branch
    %23 = sbr.rel (0) target = $region25
  $region24: #{generator_forward.1} parent=0 // pred_region
    _
  $region25: #{generator_forward.1} parent=0 // pred_fallthru
    _
  // Predicated region
  $region26: #{generator_forward.1} parent=0 // pred_check
    _
  $region27: #{generator_forward.1} parent=0 // pred_check_branch
    %25 = sbr.rel (0) target = $region29
  $region28: #{generator_forward.1} parent=0 // pred_region
    _
  $region29: #{generator_forward.1} parent=0 // pred_fallthru
    _
  %v27 = vld [vmem:[%s0] sm:$0xff]
  %v28 = vld [vmem:[%s0 + $0x8] sm:$0xff]
  %v29 = vld [vmem:[%s0 + $0x10] sm:$0xff]
  %v30 = vld [vmem:[%s0 + $0x18] sm:$0xff]
  %v31 = vld [vmem:[%s0 + $0x20] sm:$0xff]
  %v32 = vld [vmem:[%s0 + $0x28] sm:$0xff]
  %v33 = vld [vmem:[%s0 + $0x30] sm:$0xff]
  %v34 = vld [vmem:[%s0 + $0x38] sm:$0xff]
  %v35 = vld [vmem:[%s0 + $0x40] sm:$0xff]
  %v36 = vld [vmem:[%s0 + $0x48] sm:$0xff]
  %v37 = vld [vmem:[%s0 + $0x50] sm:$0xff]
  %v38 = vld [vmem:[%s0 + $0x58] sm:$0xff]
  %v39 = vld [vmem:[%s0 + $0x60] sm:$0xff]
  %v40 = vld [vmem:[%s0 + $0x68] sm:$0xff]
  %v41 = vld [vmem:[%s0 + $0x70] sm:$0xff]
  %v42 = vld [vmem:[%s0 + $0x78] sm:$0xff]
  %v43 = vld [vmem:[%s0 + $0x80] sm:$0xff]
  %v44 = vld [vmem:[%s0 + $0x88] sm:$0xff]
  %v45 = vld [vmem:[%s0 + $0x90] sm:$0xff]
  %v46 = vld [vmem:[%s0 + $0x98] sm:$0xff]
  %v47 = vld [vmem:[%s0 + $0xa0] sm:$0xff]
  %v48 = vld [vmem:[%s0 + $0xa8] sm:$0xff]
  %v49 = vld [vmem:[%s0 + $0xb0] sm:$0xff]
  %v50 = vld [vmem:[%s0 + $0xb8] sm:$0xff]
  %v51 = vld [vmem:[%s0 + $0xc0] sm:$0xff]
  %v52 = vld [vmem:[%s0 + $0xc8] sm:$0xff]
  %v53 = vld [vmem:[%s0 + $0xd0] sm:$0xff]
  %v54 = vld [vmem:[%s0 + $0xd8] sm:$0xff]
  %v55 = vld [vmem:[%s0 + $0xe0] sm:$0xff]
  %v56 = vld [vmem:[%s0 + $0xe8] sm:$0xff]
  %v57 = vld [vmem:[%s0 + $0xf0] sm:$0xff]
  %v58 = vld [vmem:[%s0 + $0xf8] sm:$0xff]
  %v59 = vpack.c.bf16 %v28, %v27
  %v60 = vpack.c.bf16 %v30, %v29
  %v61 = vpack.c.bf16 %v32, %v31
  %v62 = vpack.c.bf16 %v34, %v33
  %v63 = vpack.c.bf16 %v36, %v35
  %v64 = vpack.c.bf16 %v38, %v37
  %v65 = vpack.c.bf16 %v40, %v39
  %v66 = vpack.c.bf16 %v42, %v41
  %v67 = vpack.c.bf16 %v44, %v43
  %v68 = vpack.c.bf16 %v46, %v45
  %v69 = vpack.c.bf16 %v48, %v47
  %v70 = vpack.c.bf16 %v50, %v49
  %v71 = vpack.c.bf16 %v52, %v51
  %v72 = vpack.c.bf16 %v54, %v53
  %v73 = vpack.c.bf16 %v56, %v55
  %v74 = vpack.c.bf16 %v58, %v57
  %v75 = vld [vmem:[%s1] sm:$0xf]
  %v76 = vld [vmem:[%s1 + $0x4] sm:$0xf]
  %v77 = vld [vmem:[%s2] sm:$0x1]
  %v79 = vlaneseq
  %v80 = vshrl.u32 %v79, 7
  %v81 = vsub.s32 0, %v80
  %v82 = vrot.slane %v77, %v81
  %v86 = vunpack.c.l.b16 %v75
  %v87 = vunpack.c.l.b16 %v76
  %v88 = vpack.c.b16 %v87, %v86
  %vm90 = vcmask 130048
  %v92 = vsel %vm90, %v59, 0
  %v95 = vsel %vm90, %v60, 0
  %v98 = vsel %vm90, %v61, 0
  %v101 = vsel %vm90, %v62, 0
  %v104 = vsel %vm90, %v63, 0
  %v107 = vsel %vm90, %v64, 0
  %v110 = vsel %vm90, %v65, 0
  %v113 = vsel %vm90, %v66, 0
  %v116 = vsel %vm90, %v67, 0
  %v119 = vsel %vm90, %v68, 0
  %v122 = vsel %vm90, %v69, 0
  %v125 = vsel %vm90, %v70, 0
  %v128 = vsel %vm90, %v71, 0
  %v131 = vsel %vm90, %v72, 0
  %v134 = vsel %vm90, %v73, 0
  %v137 = vsel %vm90, %v74, 0
  %139 = vmatprep.subr.bf16.mxu0 0
  %140 = vmatpush1.bf16.msra.mxu0 %v88
  %141 = vmatprep.subr.bf16.mxu0 0
  %142 = vmatpush1.bf16.msra.mxu0 0
  %143 = vmatprep.subr.bf16.mxu0 0
  %144 = vmatpush1.bf16.msra.mxu0 0
  %145 = vmatprep.subr.bf16.mxu0 0
  %146 = vmatpush1.bf16.msra.mxu0 0
  %147 = vmatprep.subr.bf16.mxu0 0
  %148 = vmatpush1.bf16.msra.mxu0 0
  %149 = vmatprep.subr.bf16.mxu0 0
  %150 = vmatpush1.bf16.msra.mxu0 0
  %151 = vmatprep.subr.bf16.mxu0 0
  %152 = vmatpush1.bf16.msra.mxu0 0
  %153 = vmatprep.subr.bf16.mxu0 0
  %154 = vmatpush1.bf16.msra.mxu0 0
  %155 = vmatprep.subr.bf16.mxu0 0
  %156 = vmatpush1.bf16.msra.mxu0 0
  %157 = vmatprep.subr.bf16.mxu0 0
  %158 = vmatpush1.bf16.msra.mxu0 0
  %159 = vmatprep.subr.bf16.mxu0 0
  %160 = vmatpush1.bf16.msra.mxu0 0
  %161 = vmatprep.subr.bf16.mxu0 0
  %162 = vmatpush1.bf16.msra.mxu0 0
  %163 = vmatprep.subr.bf16.mxu0 0
  %164 = vmatpush1.bf16.msra.mxu0 0
  %165 = vmatprep.subr.bf16.mxu0 0
  %166 = vmatpush1.bf16.msra.mxu0 0
  %167 = vmatprep.subr.bf16.mxu0 0
  %168 = vmatpush1.bf16.msra.mxu0 0
  %169 = vmatprep.subr.bf16.mxu0 0
  %170 = vmatpush1.bf16.msra.mxu0 0
  %171 = vmatprep.mubr.bf16.mxu0 0
  %172 = vmatmul.mubr.bf16.gmra.mrb[0].mxu0 %v92
  %v173 = vpop.f32.mrb[0].mxu0
  %v174 = vadd.f32 %v82, %v173
  %v175 = vpop.f32.mrb[0].mxu0
  %v176 = vpop.f32.mrb[0].mxu0
  %v177 = vadd.f32 %v82, %v176
  %v178 = vpop.f32.mrb[0].mxu0
  %179 = vmatprep.mubr.bf16.mxu0 0
  %180 = vmatmul.mubr.bf16.gmra.mrb[0].mxu0 %v95
  %v181 = vpop.f32.mrb[0].mxu0
  %v182 = vadd.f32 %v82, %v181
  %v183 = vpop.f32.mrb[0].mxu0
  %v184 = vpop.f32.mrb[0].mxu0
  %v185 = vadd.f32 %v82, %v184
  %v186 = vpop.f32.mrb[0].mxu0
  %187 = vmatprep.mubr.bf16.mxu0 0
  %188 = vmatmul.mubr.bf16.gmra.mrb[0].mxu0 %v98
  %v189 = vpop.f32.mrb[0].mxu0
  %v190 = vadd.f32 %v82, %v189
  %v191 = vpop.f32.mrb[0].mxu0
  %v192 = vpop.f32.mrb[0].mxu0
  %v193 = vadd.f32 %v82, %v192
  %v194 = vpop.f32.mrb[0].mxu0
  %195 = vmatprep.mubr.bf16.mxu0 0
  %196 = vmatmul.mubr.bf16.gmra.mrb[0].mxu0 %v101
  %v197 = vpop.f32.mrb[0].mxu0
  %v198 = vadd.f32 %v82, %v197
  %v199 = vpop.f32.mrb[0].mxu0
  %v200 = vpop.f32.mrb[0].mxu0
  %v201 = vadd.f32 %v82, %v200
  %v202 = vpop.f32.mrb[0].mxu0
  %203 = vmatprep.mubr.bf16.mxu0 0
  %204 = vmatmul.mubr.bf16.gmra.mrb[0].mxu0 %v104
  %v205 = vpop.f32.mrb[0].mxu0
  %v206 = vadd.f32 %v82, %v205
  %v207 = vpop.f32.mrb[0].mxu0
  %v208 = vpop.f32.mrb[0].mxu0
  %v209 = vadd.f32 %v82, %v208
  %v210 = vpop.f32.mrb[0].mxu0
  %211 = vmatprep.mubr.bf16.mxu0 0
  %212 = vmatmul.mubr.bf16.gmra.mrb[0].mxu0 %v107
  %v213 = vpop.f32.mrb[0].mxu0
  %v214 = vadd.f32 %v82, %v213
  %v215 = vpop.f32.mrb[0].mxu0
  %v216 = vpop.f32.mrb[0].mxu0
  %v217 = vadd.f32 %v82, %v216
  %v218 = vpop.f32.mrb[0].mxu0
  %219 = vmatprep.mubr.bf16.mxu0 0
  %220 = vmatmul.mubr.bf16.gmra.mrb[0].mxu0 %v110
  %v221 = vpop.f32.mrb[0].mxu0
  %v222 = vadd.f32 %v82, %v221
  %v223 = vpop.f32.mrb[0].mxu0
  %v224 = vpop.f32.mrb[0].mxu0
  %v225 = vadd.f32 %v82, %v224
  %v226 = vpop.f32.mrb[0].mxu0
  %227 = vmatprep.mubr.bf16.mxu0 0
  %228 = vmatmul.mubr.bf16.gmra.mrb[0].mxu0 %v113
  %v229 = vpop.f32.mrb[0].mxu0
  %v230 = vadd.f32 %v82, %v229
  %v231 = vpop.f32.mrb[0].mxu0
  %v232 = vpop.f32.mrb[0].mxu0
  %v233 = vadd.f32 %v82, %v232
  %v234 = vpop.f32.mrb[0].mxu0
  %235 = vmatprep.mubr.bf16.mxu0 0
  %236 = vmatmul.mubr.bf16.gmra.mrb[0].mxu0 %v116
  %v237 = vpop.f32.mrb[0].mxu0
  %v238 = vadd.f32 %v82, %v237
  %v239 = vpop.f32.mrb[0].mxu0
  %v240 = vpop.f32.mrb[0].mxu0
  %v241 = vadd.f32 %v82, %v240
  %v242 = vpop.f32.mrb[0].mxu0
  %243 = vmatprep.mubr.bf16.mxu0 0
  %244 = vmatmul.mubr.bf16.gmra.mrb[0].mxu0 %v119
  %v245 = vpop.f32.mrb[0].mxu0
  %v246 = vadd.f32 %v82, %v245
  %v247 = vpop.f32.mrb[0].mxu0
  %v248 = vpop.f32.mrb[0].mxu0
  %v249 = vadd.f32 %v82, %v248
  %v250 = vpop.f32.mrb[0].mxu0
  %251 = vmatprep.mubr.bf16.mxu0 0
  %252 = vmatmul.mubr.bf16.gmra.mrb[0].mxu0 %v122
  %v253 = vpop.f32.mrb[0].mxu0
  %v254 = vadd.f32 %v82, %v253
  %v255 = vpop.f32.mrb[0].mxu0
  %v256 = vpop.f32.mrb[0].mxu0
  %v257 = vadd.f32 %v82, %v256
  %v258 = vpop.f32.mrb[0].mxu0
  %259 = vmatprep.mubr.bf16.mxu0 0
  %260 = vmatmul.mubr.bf16.gmra.mrb[0].mxu0 %v125
  %v261 = vpop.f32.mrb[0].mxu0
  %v262 = vadd.f32 %v82, %v261
  %v263 = vpop.f32.mrb[0].mxu0
  %v264 = vpop.f32.mrb[0].mxu0
  %v265 = vadd.f32 %v82, %v264
  %v266 = vpop.f32.mrb[0].mxu0
  %267 = vmatprep.mubr.bf16.mxu0 0
  %268 = vmatmul.mubr.bf16.gmra.mrb[0].mxu0 %v128
  %v269 = vpop.f32.mrb[0].mxu0
  %v270 = vadd.f32 %v82, %v269
  %v271 = vpop.f32.mrb[0].mxu0
  %v272 = vpop.f32.mrb[0].mxu0
  %v273 = vadd.f32 %v82, %v272
  %v274 = vpop.f32.mrb[0].mxu0
  %275 = vmatprep.mubr.bf16.mxu0 0
  %276 = vmatmul.mubr.bf16.gmra.mrb[0].mxu0 %v131
  %v277 = vpop.f32.mrb[0].mxu0
  %v278 = vadd.f32 %v82, %v277
  %v279 = vpop.f32.mrb[0].mxu0
  %v280 = vpop.f32.mrb[0].mxu0
  %v281 = vadd.f32 %v82, %v280
  %v282 = vpop.f32.mrb[0].mxu0
  %283 = vmatprep.mubr.bf16.mxu0 0
  %284 = vmatmul.mubr.bf16.gmra.mrb[0].mxu0 %v134
  %v285 = vpop.f32.mrb[0].mxu0
  %v286 = vadd.f32 %v82, %v285
  %v287 = vpop.f32.mrb[0].mxu0
  %v288 = vpop.f32.mrb[0].mxu0
  %v289 = vadd.f32 %v82, %v288
  %v290 = vpop.f32.mrb[0].mxu0
  %291 = vmatprep.mubr.bf16.mxu0 0
  %292 = vmatmul.mubr.bf16.gmra.mrb[0].mxu0 %v137
  %v293 = vpop.f32.mrb[0].mxu0
  %v294 = vadd.f32 %v82, %v293
  %v295 = vpop.f32.mrb[0].mxu0
  %v296 = vpop.f32.mrb[0].mxu0
  %v297 = vadd.f32 %v82, %v296
  %v298 = vpop.f32.mrb[0].mxu0
  %299 = vdwg.mxu0
  %v300 = vmul.f32 %v174, 0.1
  %v301 = vmul.f32 %v177, 0.1
  %v302 = vmul.f32 %v182, 0.1
  %v303 = vmul.f32 %v185, 0.1
  %v304 = vmul.f32 %v190, 0.1
  %v305 = vmul.f32 %v193, 0.1
  %v306 = vmul.f32 %v198, 0.1
  %v307 = vmul.f32 %v201, 0.1
  %v308 = vmul.f32 %v206, 0.1
  %v309 = vmul.f32 %v209, 0.1
  %v310 = vmul.f32 %v214, 0.1
  %v311 = vmul.f32 %v217, 0.1
  %v312 = vmul.f32 %v222, 0.1
  %v313 = vmul.f32 %v225, 0.1
  %v314 = vmul.f32 %v230, 0.1
  %v315 = vmul.f32 %v233, 0.1
  %v316 = vmul.f32 %v238, 0.1
  %v317 = vmul.f32 %v241, 0.1
  %v318 = vmul.f32 %v246, 0.1
  %v319 = vmul.f32 %v249, 0.1
  %v320 = vmul.f32 %v254, 0.1
  %v321 = vmul.f32 %v257, 0.1
  %v322 = vmul.f32 %v262, 0.1
  %v323 = vmul.f32 %v265, 0.1
  %v324 = vmul.f32 %v270, 0.1
  %v325 = vmul.f32 %v273, 0.1
  %v326 = vmul.f32 %v278, 0.1
  %v327 = vmul.f32 %v281, 0.1
  %v328 = vmul.f32 %v286, 0.1
  %v329 = vmul.f32 %v289, 0.1
  %v330 = vmul.f32 %v294, 0.1
  %v331 = vmul.f32 %v297, 0.1
  %v332 = vmax.f32 %v174, %v300
  %v333 = vmax.f32 %v177, %v301
  %v334 = vmax.f32 %v182, %v302
  %v335 = vmax.f32 %v185, %v303
  %v336 = vmax.f32 %v190, %v304
  %v337 = vmax.f32 %v193, %v305
  %v338 = vmax.f32 %v198, %v306
  %v339 = vmax.f32 %v201, %v307
  %v340 = vmax.f32 %v206, %v308
  %v341 = vmax.f32 %v209, %v309
  %v342 = vmax.f32 %v214, %v310
  %v343 = vmax.f32 %v217, %v311
  %v344 = vmax.f32 %v222, %v312
  %v345 = vmax.f32 %v225, %v313
  %v346 = vmax.f32 %v230, %v314
  %v347 = vmax.f32 %v233, %v315
  %v348 = vmax.f32 %v238, %v316
  %v349 = vmax.f32 %v241, %v317
  %v350 = vmax.f32 %v246, %v318
  %v351 = vmax.f32 %v249, %v319
  %v352 = vmax.f32 %v254, %v320
  %v353 = vmax.f32 %v257, %v321
  %v354 = vmax.f32 %v262, %v322
  %v355 = vmax.f32 %v265, %v323
  %v356 = vmax.f32 %v270, %v324
  %v357 = vmax.f32 %v273, %v325
  %v358 = vmax.f32 %v278, %v326
  %v359 = vmax.f32 %v281, %v327
  %v360 = vmax.f32 %v286, %v328
  %v361 = vmax.f32 %v289, %v329
  %v362 = vmax.f32 %v294, %v330
  %v363 = vmax.f32 %v297, %v331
  %v364 = vpack.c.bf16 %v333, %v332
  %v365 = vpack.c.bf16 %v335, %v334
  %v366 = vpack.c.bf16 %v337, %v336
  %v367 = vpack.c.bf16 %v339, %v338
  %v368 = vpack.c.bf16 %v341, %v340
  %v369 = vpack.c.bf16 %v343, %v342
  %v370 = vpack.c.bf16 %v345, %v344
  %v371 = vpack.c.bf16 %v347, %v346
  %v372 = vpack.c.bf16 %v349, %v348
  %v373 = vpack.c.bf16 %v351, %v350
  %v374 = vpack.c.bf16 %v353, %v352
  %v375 = vpack.c.bf16 %v355, %v354
  %v376 = vpack.c.bf16 %v357, %v356
  %v377 = vpack.c.bf16 %v359, %v358
  %v378 = vpack.c.bf16 %v361, %v360
  %v379 = vpack.c.bf16 %v363, %v362
  %v380 = vld [vmem:[%s3] sm:$0xf]
  %v381 = vld [vmem:[%s3 + $0x4] sm:$0xf]
  %v382 = vld [vmem:[%s3 + $0x8] sm:$0xf]
  %v383 = vld [vmem:[%s3 + $0xc] sm:$0xf]
  %v384 = vld [vmem:[%s3 + $0x10] sm:$0xf]
  %v385 = vld [vmem:[%s3 + $0x14] sm:$0xf]
  %v386 = vld [vmem:[%s3 + $0x18] sm:$0xf]
  %v387 = vld [vmem:[%s3 + $0x1c] sm:$0xf]
  %v388 = vld [vmem:[%s3 + $0x20] sm:$0xf]
  %v389 = vld [vmem:[%s3 + $0x24] sm:$0xf]
  %v390 = vld [vmem:[%s3 + $0x28] sm:$0xf]
  %v391 = vld [vmem:[%s3 + $0x2c] sm:$0xf]
  %v392 = vld [vmem:[%s3 + $0x30] sm:$0xf]
  %v393 = vld [vmem:[%s3 + $0x34] sm:$0xf]
  %v394 = vld [vmem:[%s3 + $0x38] sm:$0xf]
  %v395 = vld [vmem:[%s3 + $0x3c] sm:$0xf]
  %v396 = vld [vmem:[%s4] sm:$0x1]
  %v398 = vlaneseq
  %v399 = vshrl.u32 %v398, 7
  %v400 = vsub.s32 0, %v399
  %v401 = vrot.slane %v396, %v400
  %v419 = vunpack.c.l.b16 %v380
  %v420 = vunpack.c.l.b16 %v381
  %v421 = vunpack.c.l.b16 %v382
  %v422 = vunpack.c.l.b16 %v383
  %v423 = vunpack.c.l.b16 %v384
  %v424 = vunpack.c.l.b16 %v385
  %v425 = vunpack.c.l.b16 %v386
  %v426 = vunpack.c.l.b16 %v387
  %v427 = vunpack.c.l.b16 %v388
  %v428 = vunpack.c.l.b16 %v389
  %v429 = vunpack.c.l.b16 %v390
  %v430 = vunpack.c.l.b16 %v391
  %v431 = vunpack.c.l.b16 %v392
  %v432 = vunpack.c.l.b16 %v393
  %v433 = vunpack.c.l.b16 %v394
  %v434 = vunpack.c.l.b16 %v395
  %v435 = vpack.c.b16 %v420, %v419
  %v436 = vpack.c.b16 %v422, %v421
  %v437 = vpack.c.b16 %v424, %v423
  %v438 = vpack.c.b16 %v426, %v425
  %v439 = vpack.c.b16 %v428, %v427
  %v440 = vpack.c.b16 %v430, %v429
  %v441 = vpack.c.b16 %v432, %v431
  %v442 = vpack.c.b16 %v434, %v433
  %451 = vmatprep.subr.bf16.mxu0 0
  %452 = vmatpush1.bf16.msra.mxu0 %v435
  %453 = vmatprep.subr.bf16.mxu0 0
  %454 = vmatpush1.bf16.msra.mxu0 %v436
  %455 = vmatprep.subr.bf16.mxu0 0
  %456 = vmatpush1.bf16.msra.mxu0 %v437
  %457 = vmatprep.subr.bf16.mxu0 0
  %458 = vmatpush1.bf16.msra.mxu0 %v438
  %459 = vmatprep.subr.bf16.mxu0 0
  %460 = vmatpush1.bf16.msra.mxu0 %v439
  %461 = vmatprep.subr.bf16.mxu0 0
  %462 = vmatpush1.bf16.msra.mxu0 %v440
  %463 = vmatprep.subr.bf16.mxu0 0
  %464 = vmatpush1.bf16.msra.mxu0 %v441
  %465 = vmatprep.subr.bf16.mxu0 0
  %466 = vmatpush1.bf16.msra.mxu0 %v442
  %467 = vmatprep.subr.bf16.mxu0 0
  %468 = vmatpush1.bf16.msra.mxu0 0
  %469 = vmatprep.subr.bf16.mxu0 0
  %470 = vmatpush1.bf16.msra.mxu0 0
  %471 = vmatprep.subr.bf16.mxu0 0
  %472 = vmatpush1.bf16.msra.mxu0 0
  %473 = vmatprep.subr.bf16.mxu0 0
  %474 = vmatpush1.bf16.msra.mxu0 0
  %475 = vmatprep.subr.bf16.mxu0 0
  %476 = vmatpush1.bf16.msra.mxu0 0
  %477 = vmatprep.subr.bf16.mxu0 0
  %478 = vmatpush1.bf16.msra.mxu0 0
  %479 = vmatprep.subr.bf16.mxu0 0
  %480 = vmatpush1.bf16.msra.mxu0 0
  %481 = vmatprep.subr.bf16.mxu0 0
  %482 = vmatpush1.bf16.msra.mxu0 0
  %483 = vmatprep.mubr.bf16.mxu0 0
  %484 = vmatmul.mubr.bf16.gmra.mrb[0].mxu0 %v364
  %v485 = vpop.f32.mrb[0].mxu0
  %v486 = vadd.f32 %v401, %v485
  %v487 = vpop.f32.mrb[0].mxu0
  %v488 = vpop.f32.mrb[0].mxu0
  %v489 = vadd.f32 %v401, %v488
  %v490 = vpop.f32.mrb[0].mxu0
  %491 = vmatprep.mubr.bf16.mxu0 0
  %492 = vmatmul.mubr.bf16.gmra.mrb[0].mxu0 %v365
  %v493 = vpop.f32.mrb[0].mxu0
  %v494 = vadd.f32 %v401, %v493
  %v495 = vpop.f32.mrb[0].mxu0
  %v496 = vpop.f32.mrb[0].mxu0
  %v497 = vadd.f32 %v401, %v496
  %v498 = vpop.f32.mrb[0].mxu0
  %499 = vmatprep.mubr.bf16.mxu0 0
  %500 = vmatmul.mubr.bf16.gmra.mrb[0].mxu0 %v366
  %v501 = vpop.f32.mrb[0].mxu0
  %v502 = vadd.f32 %v401, %v501
  %v503 = vpop.f32.mrb[0].mxu0
  %v504 = vpop.f32.mrb[0].mxu0
  %v505 = vadd.f32 %v401, %v504
  %v506 = vpop.f32.mrb[0].mxu0
  %507 = vmatprep.mubr.bf16.mxu0 0
  %508 = vmatmul.mubr.bf16.gmra.mrb[0].mxu0 %v367
  %v509 = vpop.f32.mrb[0].mxu0
  %v510 = vadd.f32 %v401, %v509
  %v511 = vpop.f32.mrb[0].mxu0
  %v512 = vpop.f32.mrb[0].mxu0
  %v513 = vadd.f32 %v401, %v512
  %v514 = vpop.f32.mrb[0].mxu0
  %515 = vmatprep.mubr.bf16.mxu0 0
  %516 = vmatmul.mubr.bf16.gmra.mrb[0].mxu0 %v368
  %v517 = vpop.f32.mrb[0].mxu0
  %v518 = vadd.f32 %v401, %v517
  %v519 = vpop.f32.mrb[0].mxu0
  %v520 = vpop.f32.mrb[0].mxu0
  %v521 = vadd.f32 %v401, %v520
  %v522 = vpop.f32.mrb[0].mxu0
  %523 = vmatprep.mubr.bf16.mxu0 0
  %524 = vmatmul.mubr.bf16.gmra.mrb[0].mxu0 %v369
  %v525 = vpop.f32.mrb[0].mxu0
  %v526 = vadd.f32 %v401, %v525
  %v527 = vpop.f32.mrb[0].mxu0
  %v528 = vpop.f32.mrb[0].mxu0
  %v529 = vadd.f32 %v401, %v528
  %v530 = vpop.f32.mrb[0].mxu0
  %531 = vmatprep.mubr.bf16.mxu0 0
  %532 = vmatmul.mubr.bf16.gmra.mrb[0].mxu0 %v370
  %v533 = vpop.f32.mrb[0].mxu0
  %v534 = vadd.f32 %v401, %v533
  %v535 = vpop.f32.mrb[0].mxu0
  %v536 = vpop.f32.mrb[0].mxu0
  %v537 = vadd.f32 %v401, %v536
  %v538 = vpop.f32.mrb[0].mxu0
  %539 = vmatprep.mubr.bf16.mxu0 0
  %540 = vmatmul.mubr.bf16.gmra.mrb[0].mxu0 %v371
  %v541 = vpop.f32.mrb[0].mxu0
  %v542 = vadd.f32 %v401, %v541
  %v543 = vpop.f32.mrb[0].mxu0
  %v544 = vpop.f32.mrb[0].mxu0
  %v545 = vadd.f32 %v401, %v544
  %v546 = vpop.f32.mrb[0].mxu0
  %547 = vmatprep.mubr.bf16.mxu0 0
  %548 = vmatmul.mubr.bf16.gmra.mrb[0].mxu0 %v372
  %v549 = vpop.f32.mrb[0].mxu0
  %v550 = vadd.f32 %v401, %v549
  %v551 = vpop.f32.mrb[0].mxu0
  %v552 = vpop.f32.mrb[0].mxu0
  %v553 = vadd.f32 %v401, %v552
  %v554 = vpop.f32.mrb[0].mxu0
  %555 = vmatprep.mubr.bf16.mxu0 0
  %556 = vmatmul.mubr.bf16.gmra.mrb[0].mxu0 %v373
  %v557 = vpop.f32.mrb[0].mxu0
  %v558 = vadd.f32 %v401, %v557
  %v559 = vpop.f32.mrb[0].mxu0
  %v560 = vpop.f32.mrb[0].mxu0
  %v561 = vadd.f32 %v401, %v560
  %v562 = vpop.f32.mrb[0].mxu0
  %563 = vmatprep.mubr.bf16.mxu0 0
  %564 = vmatmul.mubr.bf16.gmra.mrb[0].mxu0 %v374
  %v565 = vpop.f32.mrb[0].mxu0
  %v566 = vadd.f32 %v401, %v565
  %v567 = vpop.f32.mrb[0].mxu0
  %v568 = vpop.f32.mrb[0].mxu0
  %v569 = vadd.f32 %v401, %v568
  %v570 = vpop.f32.mrb[0].mxu0
  %571 = vmatprep.mubr.bf16.mxu0 0
  %572 = vmatmul.mubr.bf16.gmra.mrb[0].mxu0 %v375
  %v573 = vpop.f32.mrb[0].mxu0
  %v574 = vadd.f32 %v401, %v573
  %v575 = vpop.f32.mrb[0].mxu0
  %v576 = vpop.f32.mrb[0].mxu0
  %v577 = vadd.f32 %v401, %v576
  %v578 = vpop.f32.mrb[0].mxu0
  %579 = vmatprep.mubr.bf16.mxu0 0
  %580 = vmatmul.mubr.bf16.gmra.mrb[0].mxu0 %v376
  %v581 = vpop.f32.mrb[0].mxu0
  %v582 = vadd.f32 %v401, %v581
  %v583 = vpop.f32.mrb[0].mxu0
  %v584 = vpop.f32.mrb[0].mxu0
  %v585 = vadd.f32 %v401, %v584
  %v586 = vpop.f32.mrb[0].mxu0
  %587 = vmatprep.mubr.bf16.mxu0 0
  %588 = vmatmul.mubr.bf16.gmra.mrb[0].mxu0 %v377
  %v589 = vpop.f32.mrb[0].mxu0
  %v590 = vadd.f32 %v401, %v589
  %v591 = vpop.f32.mrb[0].mxu0
  %v592 = vpop.f32.mrb[0].mxu0
  %v593 = vadd.f32 %v401, %v592
  %v594 = vpop.f32.mrb[0].mxu0
  %595 = vmatprep.mubr.bf16.mxu0 0
  %596 = vmatmul.mubr.bf16.gmra.mrb[0].mxu0 %v378
  %v597 = vpop.f32.mrb[0].mxu0
  %v598 = vadd.f32 %v401, %v597
  %v599 = vpop.f32.mrb[0].mxu0
  %v600 = vpop.f32.mrb[0].mxu0
  %v601 = vadd.f32 %v401, %v600
  %v602 = vpop.f32.mrb[0].mxu0
  %603 = vmatprep.mubr.bf16.mxu0 0
  %604 = vmatmul.mubr.bf16.gmra.mrb[0].mxu0 %v379
  %v605 = vpop.f32.mrb[0].mxu0
  %v606 = vadd.f32 %v401, %v605
  %v607 = vpop.f32.mrb[0].mxu0
  %v608 = vpop.f32.mrb[0].mxu0
  %v609 = vadd.f32 %v401, %v608
  %v610 = vpop.f32.mrb[0].mxu0
  %611 = vdwg.mxu0
  %v612 = vmul.f32 %v486, 0.1
  %v613 = vmul.f32 %v489, 0.1
  %v614 = vmul.f32 %v494, 0.1
  %v615 = vmul.f32 %v497, 0.1
  %v616 = vmul.f32 %v502, 0.1
  %v617 = vmul.f32 %v505, 0.1
  %v618 = vmul.f32 %v510, 0.1
  %v619 = vmul.f32 %v513, 0.1
  %v620 = vmul.f32 %v518, 0.1
  %v621 = vmul.f32 %v521, 0.1
  %v622 = vmul.f32 %v526, 0.1
  %v623 = vmul.f32 %v529, 0.1
  %v624 = vmul.f32 %v534, 0.1
  %v625 = vmul.f32 %v537, 0.1
  %v626 = vmul.f32 %v542, 0.1
  %v627 = vmul.f32 %v545, 0.1
  %v628 = vmul.f32 %v550, 0.1
  %v629 = vmul.f32 %v553, 0.1
  %v630 = vmul.f32 %v558, 0.1
  %v631 = vmul.f32 %v561, 0.1
  %v632 = vmul.f32 %v566, 0.1
  %v633 = vmul.f32 %v569, 0.1
  %v634 = vmul.f32 %v574, 0.1
  %v635 = vmul.f32 %v577, 0.1
  %v636 = vmul.f32 %v582, 0.1
  %v637 = vmul.f32 %v585, 0.1
  %v638 = vmul.f32 %v590, 0.1
  %v639 = vmul.f32 %v593, 0.1
  %v640 = vmul.f32 %v598, 0.1
  %v641 = vmul.f32 %v601, 0.1
  %v642 = vmul.f32 %v606, 0.1
  %v643 = vmul.f32 %v609, 0.1
  %v644 = vmax.f32 %v486, %v612
  %v645 = vmax.f32 %v489, %v613
  %v646 = vmax.f32 %v494, %v614
  %v647 = vmax.f32 %v497, %v615
  %v648 = vmax.f32 %v502, %v616
  %v649 = vmax.f32 %v505, %v617
  %v650 = vmax.f32 %v510, %v618
  %v651 = vmax.f32 %v513, %v619
  %v652 = vmax.f32 %v518, %v620
  %v653 = vmax.f32 %v521, %v621
  %v654 = vmax.f32 %v526, %v622
  %v655 = vmax.f32 %v529, %v623
  %v656 = vmax.f32 %v534, %v624
  %v657 = vmax.f32 %v537, %v625
  %v658 = vmax.f32 %v542, %v626
  %v659 = vmax.f32 %v545, %v627
  %v660 = vmax.f32 %v550, %v628
  %v661 = vmax.f32 %v553, %v629
  %v662 = vmax.f32 %v558, %v630
  %v663 = vmax.f32 %v561, %v631
  %v664 = vmax.f32 %v566, %v632
  %v665 = vmax.f32 %v569, %v633
  %v666 = vmax.f32 %v574, %v634
  %v667 = vmax.f32 %v577, %v635
  %v668 = vmax.f32 %v582, %v636
  %v669 = vmax.f32 %v585, %v637
  %v670 = vmax.f32 %v590, %v638
  %v671 = vmax.f32 %v593, %v639
  %v672 = vmax.f32 %v598, %v640
  %v673 = vmax.f32 %v601, %v641
  %v674 = vmax.f32 %v606, %v642
  %v675 = vmax.f32 %v609, %v643
  %v676 = vpack.c.bf16 %v645, %v644
  %v677 = vpack.c.bf16 %v647, %v646
  %v678 = vpack.c.bf16 %v649, %v648
  %v679 = vpack.c.bf16 %v651, %v650
  %v680 = vpack.c.bf16 %v653, %v652
  %v681 = vpack.c.bf16 %v655, %v654
  %v682 = vpack.c.bf16 %v657, %v656
  %v683 = vpack.c.bf16 %v659, %v658
  %v684 = vpack.c.bf16 %v661, %v660
  %v685 = vpack.c.bf16 %v663, %v662
  %v686 = vpack.c.bf16 %v665, %v664
  %v687 = vpack.c.bf16 %v667, %v666
  %v688 = vpack.c.bf16 %v669, %v668
  %v689 = vpack.c.bf16 %v671, %v670
  %v690 = vpack.c.bf16 %v673, %v672
  %v691 = vpack.c.bf16 %v675, %v674
  %v692 = vld [vmem:[%s5] sm:$0xf]
  %v693 = vld [vmem:[%s5 + $0x4] sm:$0xf]
  %v694 = vld [vmem:[%s5 + $0x8] sm:$0xf]
  %v695 = vld [vmem:[%s5 + $0xc] sm:$0xf]
  %v696 = vld [vmem:[%s5 + $0x10] sm:$0xf]
  %v697 = vld [vmem:[%s5 + $0x14] sm:$0xf]
  %v698 = vld [vmem:[%s5 + $0x18] sm:$0xf]
  %v699 = vld [vmem:[%s5 + $0x1c] sm:$0xf]
  %v700 = vld [vmem:[%s5 + $0x20] sm:$0xf]
  %v701 = vld [vmem:[%s5 + $0x24] sm:$0xf]
  %v702 = vld [vmem:[%s5 + $0x28] sm:$0xf]
  %v703 = vld [vmem:[%s5 + $0x2c] sm:$0xf]
  %v704 = vld [vmem:[%s5 + $0x30] sm:$0xf]
  %v705 = vld [vmem:[%s5 + $0x34] sm:$0xf]
  %v706 = vld [vmem:[%s5 + $0x38] sm:$0xf]
  %v707 = vld [vmem:[%s5 + $0x3c] sm:$0xf]
  %v708 = vld [vmem:[%s6] sm:$0x1]
  %v710 = vlaneseq
  %v711 = vshrl.u32 %v710, 7
  %v712 = vsub.s32 0, %v711
  %v713 = vrot.slane %v708, %v712
  %v731 = vunpack.c.l.b16 %v692
  %v732 = vunpack.c.l.b16 %v693
  %v733 = vunpack.c.l.b16 %v694
  %v734 = vunpack.c.l.b16 %v695
  %v735 = vunpack.c.l.b16 %v696
  %v736 = vunpack.c.l.b16 %v697
  %v737 = vunpack.c.l.b16 %v698
  %v738 = vunpack.c.l.b16 %v699
  %v739 = vunpack.c.l.b16 %v700
  %v740 = vunpack.c.l.b16 %v701
  %v741 = vunpack.c.l.b16 %v702
  %v742 = vunpack.c.l.b16 %v703
  %v743 = vunpack.c.l.b16 %v704
  %v744 = vunpack.c.l.b16 %v705
  %v745 = vunpack.c.l.b16 %v706
  %v746 = vunpack.c.l.b16 %v707
  %v747 = vpack.c.b16 %v732, %v731
  %v748 = vpack.c.b16 %v734, %v733
  %v749 = vpack.c.b16 %v736, %v735
  %v750 = vpack.c.b16 %v738, %v737
  %v751 = vpack.c.b16 %v740, %v739
  %v752 = vpack.c.b16 %v742, %v741
  %v753 = vpack.c.b16 %v744, %v743
  %v754 = vpack.c.b16 %v746, %v745
  %763 = vmatprep.subr.bf16.mxu0 0
  %764 = vmatpush1.bf16.msra.mxu0 %v747
  %765 = vmatprep.subr.bf16.mxu0 0
  %766 = vmatpush1.bf16.msra.mxu0 %v748
  %767 = vmatprep.subr.bf16.mxu0 0
  %768 = vmatpush1.bf16.msra.mxu0 %v749
  %769 = vmatprep.subr.bf16.mxu0 0
  %770 = vmatpush1.bf16.msra.mxu0 %v750
  %771 = vmatprep.subr.bf16.mxu0 0
  %772 = vmatpush1.bf16.msra.mxu0 %v751
  %773 = vmatprep.subr.bf16.mxu0 0
  %774 = vmatpush1.bf16.msra.mxu0 %v752
  %775 = vmatprep.subr.bf16.mxu0 0
  %776 = vmatpush1.bf16.msra.mxu0 %v753
  %777 = vmatprep.subr.bf16.mxu0 0
  %778 = vmatpush1.bf16.msra.mxu0 %v754
  %779 = vmatprep.subr.bf16.mxu0 0
  %780 = vmatpush1.bf16.msra.mxu0 0
  %781 = vmatprep.subr.bf16.mxu0 0
  %782 = vmatpush1.bf16.msra.mxu0 0
  %783 = vmatprep.subr.bf16.mxu0 0
  %784 = vmatpush1.bf16.msra.mxu0 0
  %785 = vmatprep.subr.bf16.mxu0 0
  %786 = vmatpush1.bf16.msra.mxu0 0
  %787 = vmatprep.subr.bf16.mxu0 0
  %788 = vmatpush1.bf16.msra.mxu0 0
  %789 = vmatprep.subr.bf16.mxu0 0
  %790 = vmatpush1.bf16.msra.mxu0 0
  %791 = vmatprep.subr.bf16.mxu0 0
  %792 = vmatpush1.bf16.msra.mxu0 0
  %793 = vmatprep.subr.bf16.mxu0 0
  %794 = vmatpush1.bf16.msra.mxu0 0
  %795 = vmatprep.mubr.bf16.mxu0 0
  %796 = vmatmul.mubr.bf16.gmra.mrb[0].mxu0 %v676
  %v797 = vpop.f32.mrb[0].mxu0
  %v798 = vadd.f32 %v713, %v797
  %v799 = vpop.f32.mrb[0].mxu0
  %v800 = vpop.f32.mrb[0].mxu0
  %v801 = vadd.f32 %v713, %v800
  %v802 = vpop.f32.mrb[0].mxu0
  %803 = vmatprep.mubr.bf16.mxu0 0
  %804 = vmatmul.mubr.bf16.gmra.mrb[0].mxu0 %v677
  %v805 = vpop.f32.mrb[0].mxu0
  %v806 = vadd.f32 %v713, %v805
  %v807 = vpop.f32.mrb[0].mxu0
  %v808 = vpop.f32.mrb[0].mxu0
  %v809 = vadd.f32 %v713, %v808
  %v810 = vpop.f32.mrb[0].mxu0
  %811 = vmatprep.mubr.bf16.mxu0 0
  %812 = vmatmul.mubr.bf16.gmra.mrb[0].mxu0 %v678
  %v813 = vpop.f32.mrb[0].mxu0
  %v814 = vadd.f32 %v713, %v813
  %v815 = vpop.f32.mrb[0].mxu0
  %v816 = vpop.f32.mrb[0].mxu0
  %v817 = vadd.f32 %v713, %v816
  %v818 = vpop.f32.mrb[0].mxu0
  %819 = vmatprep.mubr.bf16.mxu0 0
  %820 = vmatmul.mubr.bf16.gmra.mrb[0].mxu0 %v679
  %v821 = vpop.f32.mrb[0].mxu0
  %v822 = vadd.f32 %v713, %v821
  %v823 = vpop.f32.mrb[0].mxu0
  %v824 = vpop.f32.mrb[0].mxu0
  %v825 = vadd.f32 %v713, %v824
  %v826 = vpop.f32.mrb[0].mxu0
  %827 = vmatprep.mubr.bf16.mxu0 0
  %828 = vmatmul.mubr.bf16.gmra.mrb[0].mxu0 %v680
  %v829 = vpop.f32.mrb[0].mxu0
  %v830 = vadd.f32 %v713, %v829
  %v831 = vpop.f32.mrb[0].mxu0
  %v832 = vpop.f32.mrb[0].mxu0
  %v833 = vadd.f32 %v713, %v832
  %v834 = vpop.f32.mrb[0].mxu0
  %835 = vmatprep.mubr.bf16.mxu0 0
  %836 = vmatmul.mubr.bf16.gmra.mrb[0].mxu0 %v681
  %v837 = vpop.f32.mrb[0].mxu0
  %v838 = vadd.f32 %v713, %v837
  %v839 = vpop.f32.mrb[0].mxu0
  %v840 = vpop.f32.mrb[0].mxu0
  %v841 = vadd.f32 %v713, %v840
  %v842 = vpop.f32.mrb[0].mxu0
  %843 = vmatprep.mubr.bf16.mxu0 0
  %844 = vmatmul.mubr.bf16.gmra.mrb[0].mxu0 %v682
  %v845 = vpop.f32.mrb[0].mxu0
  %v846 = vadd.f32 %v713, %v845
  %v847 = vpop.f32.mrb[0].mxu0
  %v848 = vpop.f32.mrb[0].mxu0
  %v849 = vadd.f32 %v713, %v848
  %v850 = vpop.f32.mrb[0].mxu0
  %851 = vmatprep.mubr.bf16.mxu0 0
  %852 = vmatmul.mubr.bf16.gmra.mrb[0].mxu0 %v683
  %v853 = vpop.f32.mrb[0].mxu0
  %v854 = vadd.f32 %v713, %v853
  %v855 = vpop.f32.mrb[0].mxu0
  %v856 = vpop.f32.mrb[0].mxu0
  %v857 = vadd.f32 %v713, %v856
  %v858 = vpop.f32.mrb[0].mxu0
  %859 = vmatprep.mubr.bf16.mxu0 0
  %860 = vmatmul.mubr.bf16.gmra.mrb[0].mxu0 %v684
  %v861 = vpop.f32.mrb[0].mxu0
  %v862 = vadd.f32 %v713, %v861
  %v863 = vpop.f32.mrb[0].mxu0
  %v864 = vpop.f32.mrb[0].mxu0
  %v865 = vadd.f32 %v713, %v864
  %v866 = vpop.f32.mrb[0].mxu0
  %867 = vmatprep.mubr.bf16.mxu0 0
  %868 = vmatmul.mubr.bf16.gmra.mrb[0].mxu0 %v685
  %v869 = vpop.f32.mrb[0].mxu0
  %v870 = vadd.f32 %v713, %v869
  %v871 = vpop.f32.mrb[0].mxu0
  %v872 = vpop.f32.mrb[0].mxu0
  %v873 = vadd.f32 %v713, %v872
  %v874 = vpop.f32.mrb[0].mxu0
  %875 = vmatprep.mubr.bf16.mxu0 0
  %876 = vmatmul.mubr.bf16.gmra.mrb[0].mxu0 %v686
  %v877 = vpop.f32.mrb[0].mxu0
  %v878 = vadd.f32 %v713, %v877
  %v879 = vpop.f32.mrb[0].mxu0
  %v880 = vpop.f32.mrb[0].mxu0
  %v881 = vadd.f32 %v713, %v880
  %v882 = vpop.f32.mrb[0].mxu0
  %883 = vmatprep.mubr.bf16.mxu0 0
  %884 = vmatmul.mubr.bf16.gmra.mrb[0].mxu0 %v687
  %v885 = vpop.f32.mrb[0].mxu0
  %v886 = vadd.f32 %v713, %v885
  %v887 = vpop.f32.mrb[0].mxu0
  %v888 = vpop.f32.mrb[0].mxu0
  %v889 = vadd.f32 %v713, %v888
  %v890 = vpop.f32.mrb[0].mxu0
  %891 = vmatprep.mubr.bf16.mxu0 0
  %892 = vmatmul.mubr.bf16.gmra.mrb[0].mxu0 %v688
  %v893 = vpop.f32.mrb[0].mxu0
  %v894 = vadd.f32 %v713, %v893
  %v895 = vpop.f32.mrb[0].mxu0
  %v896 = vpop.f32.mrb[0].mxu0
  %v897 = vadd.f32 %v713, %v896
  %v898 = vpop.f32.mrb[0].mxu0
  %899 = vmatprep.mubr.bf16.mxu0 0
  %900 = vmatmul.mubr.bf16.gmra.mrb[0].mxu0 %v689
  %v901 = vpop.f32.mrb[0].mxu0
  %v902 = vadd.f32 %v713, %v901
  %v903 = vpop.f32.mrb[0].mxu0
  %v904 = vpop.f32.mrb[0].mxu0
  %v905 = vadd.f32 %v713, %v904
  %v906 = vpop.f32.mrb[0].mxu0
  %907 = vmatprep.mubr.bf16.mxu0 0
  %908 = vmatmul.mubr.bf16.gmra.mrb[0].mxu0 %v690
  %v909 = vpop.f32.mrb[0].mxu0
  %v910 = vadd.f32 %v713, %v909
  %v911 = vpop.f32.mrb[0].mxu0
  %v912 = vpop.f32.mrb[0].mxu0
  %v913 = vadd.f32 %v713, %v912
  %v914 = vpop.f32.mrb[0].mxu0
  %915 = vmatprep.mubr.bf16.mxu0 0
  %916 = vmatmul.mubr.bf16.gmra.mrb[0].mxu0 %v691
  %v917 = vpop.f32.mrb[0].mxu0
  %v918 = vadd.f32 %v713, %v917
  %v919 = vpop.f32.mrb[0].mxu0
  %v920 = vpop.f32.mrb[0].mxu0
  %v921 = vadd.f32 %v713, %v920
  %v922 = vpop.f32.mrb[0].mxu0
  %923 = vdwg.mxu0
  %v924 = vtanh.pop %v798
  %v925 = vtanh.pop %v801
  %v926 = vtanh.pop %v806
  %v927 = vtanh.pop %v809
  %v928 = vtanh.pop %v814
  %v929 = vtanh.pop %v817
  %v930 = vtanh.pop %v822
  %v931 = vtanh.pop %v825
  %v932 = vtanh.pop %v830
  %v933 = vtanh.pop %v833
  %v934 = vtanh.pop %v838
  %v935 = vtanh.pop %v841
  %v936 = vtanh.pop %v846
  %v937 = vtanh.pop %v849
  %v938 = vtanh.pop %v854
  %v939 = vtanh.pop %v857
  %v940 = vtanh.pop %v862
  %v941 = vtanh.pop %v865
  %v942 = vtanh.pop %v870
  %v943 = vtanh.pop %v873
  %v944 = vtanh.pop %v878
  %v945 = vtanh.pop %v881
  %v946 = vtanh.pop %v886
  %v947 = vtanh.pop %v889
  %v948 = vtanh.pop %v894
  %v949 = vtanh.pop %v897
  %v950 = vtanh.pop %v902
  %v951 = vtanh.pop %v905
  %v952 = vtanh.pop %v910
  %v953 = vtanh.pop %v913
  %v954 = vtanh.pop %v918
  %v955 = vtanh.pop %v921
  %v956 = vpack.c.bf16 %v925, %v924
  %v957 = vpack.c.bf16 %v927, %v926
  %v958 = vpack.c.bf16 %v929, %v928
  %v959 = vpack.c.bf16 %v931, %v930
  %v960 = vpack.c.bf16 %v933, %v932
  %v961 = vpack.c.bf16 %v935, %v934
  %v962 = vpack.c.bf16 %v937, %v936
  %v963 = vpack.c.bf16 %v939, %v938
  %v964 = vpack.c.bf16 %v941, %v940
  %v965 = vpack.c.bf16 %v943, %v942
  %v966 = vpack.c.bf16 %v945, %v944
  %v967 = vpack.c.bf16 %v947, %v946
  %v968 = vpack.c.bf16 %v949, %v948
  %v969 = vpack.c.bf16 %v951, %v950
  %v970 = vpack.c.bf16 %v953, %v952
  %v971 = vpack.c.bf16 %v955, %v954
  %v988 = vunpack.c.l.b16 %v956
  %v989 = vunpack.c.h.b16 %v956
  %v990 = vunpack.c.l.b16 %v957
  %v991 = vunpack.c.h.b16 %v957
  %v992 = vunpack.c.l.b16 %v958
  %v993 = vunpack.c.h.b16 %v958
  %v994 = vunpack.c.l.b16 %v959
  %v995 = vunpack.c.h.b16 %v959
  %v996 = vunpack.c.l.b16 %v960
  %v997 = vunpack.c.h.b16 %v960
  %v998 = vunpack.c.l.b16 %v961
  %v999 = vunpack.c.h.b16 %v961
  %v1000 = vunpack.c.l.b16 %v962
  %v1001 = vunpack.c.h.b16 %v962
  %v1002 = vunpack.c.l.b16 %v963
  %v1003 = vunpack.c.h.b16 %v963
  %v1004 = vunpack.c.l.b16 %v964
  %v1005 = vunpack.c.h.b16 %v964
  %v1006 = vunpack.c.l.b16 %v965
  %v1007 = vunpack.c.h.b16 %v965
  %v1008 = vunpack.c.l.b16 %v966
  %v1009 = vunpack.c.h.b16 %v966
  %v1010 = vunpack.c.l.b16 %v967
  %v1011 = vunpack.c.h.b16 %v967
  %v1012 = vunpack.c.l.b16 %v968
  %v1013 = vunpack.c.h.b16 %v968
  %v1014 = vunpack.c.l.b16 %v969
  %v1015 = vunpack.c.h.b16 %v969
  %v1016 = vunpack.c.l.b16 %v970
  %v1017 = vunpack.c.h.b16 %v970
  %v1018 = vunpack.c.l.b16 %v971
  %v1019 = vunpack.c.h.b16 %v971
  %v1020 = vpack.c.b16 %v988, %v988
  %v1021 = vpack.c.b16 %v989, %v989
  %v1022 = vpack.c.b16 %v990, %v990
  %v1023 = vpack.c.b16 %v991, %v991
  %v1024 = vpack.c.b16 %v992, %v992
  %v1025 = vpack.c.b16 %v993, %v993
  %v1026 = vpack.c.b16 %v994, %v994
  %v1027 = vpack.c.b16 %v995, %v995
  %v1028 = vpack.c.b16 %v996, %v996
  %v1029 = vpack.c.b16 %v997, %v997
  %v1030 = vpack.c.b16 %v998, %v998
  %v1031 = vpack.c.b16 %v999, %v999
  %v1032 = vpack.c.b16 %v1000, %v1000
  %v1033 = vpack.c.b16 %v1001, %v1001
  %v1034 = vpack.c.b16 %v1002, %v1002
  %v1035 = vpack.c.b16 %v1003, %v1003
  %v1036 = vpack.c.b16 %v1004, %v1004
  %v1037 = vpack.c.b16 %v1005, %v1005
  %v1038 = vpack.c.b16 %v1006, %v1006
  %v1039 = vpack.c.b16 %v1007, %v1007
  %v1040 = vpack.c.b16 %v1008, %v1008
  %v1041 = vpack.c.b16 %v1009, %v1009
  %v1042 = vpack.c.b16 %v1010, %v1010
  %v1043 = vpack.c.b16 %v1011, %v1011
  %v1044 = vpack.c.b16 %v1012, %v1012
  %v1045 = vpack.c.b16 %v1013, %v1013
  %v1046 = vpack.c.b16 %v1014, %v1014
  %v1047 = vpack.c.b16 %v1015, %v1015
  %v1048 = vpack.c.b16 %v1016, %v1016
  %v1049 = vpack.c.b16 %v1017, %v1017
  %v1050 = vpack.c.b16 %v1018, %v1018
  %v1051 = vpack.c.b16 %v1019, %v1019
  %1084 = vst [vmem:[%s7] sm:$0xf] %v1020
  %1085 = vst [vmem:[%s7 + $0x4] sm:$0xf] %v1021
  %1086 = vst [vmem:[%s7 + $0x8] sm:$0xf] %v1022
  %1087 = vst [vmem:[%s7 + $0xc] sm:$0xf] %v1023
  %1088 = vst [vmem:[%s7 + $0x10] sm:$0xf] %v1024
  %1089 = vst [vmem:[%s7 + $0x14] sm:$0xf] %v1025
  %1090 = vst [vmem:[%s7 + $0x18] sm:$0xf] %v1026
  %1091 = vst [vmem:[%s7 + $0x1c] sm:$0xf] %v1027
  %1092 = vst [vmem:[%s7 + $0x20] sm:$0xf] %v1028
  %1093 = vst [vmem:[%s7 + $0x24] sm:$0xf] %v1029
  %1094 = vst [vmem:[%s7 + $0x28] sm:$0xf] %v1030
  %1095 = vst [vmem:[%s7 + $0x2c] sm:$0xf] %v1031
  %1096 = vst [vmem:[%s7 + $0x30] sm:$0xf] %v1032
  %1097 = vst [vmem:[%s7 + $0x34] sm:$0xf] %v1033
  %1098 = vst [vmem:[%s7 + $0x38] sm:$0xf] %v1034
  %1099 = vst [vmem:[%s7 + $0x3c] sm:$0xf] %v1035
  %1100 = vst [vmem:[%s7 + $0x40] sm:$0xf] %v1036
  %1101 = vst [vmem:[%s7 + $0x44] sm:$0xf] %v1037
  %1102 = vst [vmem:[%s7 + $0x48] sm:$0xf] %v1038
  %1103 = vst [vmem:[%s7 + $0x4c] sm:$0xf] %v1039
  %1104 = vst [vmem:[%s7 + $0x50] sm:$0xf] %v1040
  %1105 = vst [vmem:[%s7 + $0x54] sm:$0xf] %v1041
  %1106 = vst [vmem:[%s7 + $0x58] sm:$0xf] %v1042
  %1107 = vst [vmem:[%s7 + $0x5c] sm:$0xf] %v1043
  %1108 = vst [vmem:[%s7 + $0x60] sm:$0xf] %v1044
  %1109 = vst [vmem:[%s7 + $0x64] sm:$0xf] %v1045
  %1110 = vst [vmem:[%s7 + $0x68] sm:$0xf] %v1046
  %1111 = vst [vmem:[%s7 + $0x6c] sm:$0xf] %v1047
  %1112 = vst [vmem:[%s7 + $0x70] sm:$0xf] %v1048
  %1113 = vst [vmem:[%s7 + $0x74] sm:$0xf] %v1049
  %1114 = vst [vmem:[%s7 + $0x78] sm:$0xf] %v1050
  %1115 = vst [vmem:[%s7 + $0x7c] sm:$0xf] %v1051
  // Predicated region
  $region30: #{generator_forward.1} parent=0 // pred_check
    _
  $region31: #{generator_forward.1} parent=0 // pred_check_branch
    %1117 = sbr.rel (0) target = $region33
  $region32: #{generator_forward.1} parent=0 // pred_region
    _
  $region33: #{generator_forward.1} parent=0 // pred_fallthru
    _
  // Predicated region
  $region34: #{generator_forward.1} parent=0 // pred_check
    _
  $region35: #{generator_forward.1} parent=0 // pred_check_branch
    %1119 = sbr.rel (0) target = $region37
  $region36: #{generator_forward.1} parent=0 // pred_region
    _
  $region37: #{generator_forward.1} parent=0 // pred_fallthru
    _

</llo_original>
